<compile_context>
chip_gen: v7x
topology: tpu7x:2x2x1
jax: 0.10.0
libtpu: 0.0.40
codegen_flags: <defaults>
</compile_context>

<pallas_src>
import functools

import jax
import jax.numpy as jnp
from jax.experimental import pallas as pl
from jax.experimental.pallas import tpu as pltpu

BS = 4  # block_size; the PyTorch module asserts block_size == 4


def space_to_depth_kernel(x_ref, o_ref, *, precision):
    # x_ref: (4*TR, W)    rows 4*r + bh of the (C*H, W) view, r = c*Ho + ho
    # o_ref: (16, TR, Wo) output depth groups g = bh*4 + bw
    TR, Wo = o_ref.shape[1], o_ref.shape[2]
    W = x_ref.shape[1]                        # == 4 * Wo

    # Fused 0/1 lane-selection matrix, built in-registers (zero HBM/DMA cost):
    #   S[w, bw*Wo + wo] = (w == 4*wo + bw)
    # i.e. the single 1 in row w sits at column (w % 4) * Wo + w // 4.
    w_ids = jax.lax.broadcasted_iota(jnp.int32, (W, BS * Wo), 0)
    col = jax.lax.broadcasted_iota(jnp.int32, (W, BS * Wo), 1)
    sel = col == (w_ids & (BS - 1)) * Wo + (w_ids >> 2)
    s = jnp.where(sel, 1.0, 0.0).astype(x_ref.dtype)

    for bh in range(BS):
        # Sublane-strided load of the bh phase (cheap vld; data stays dense).
        xb = x_ref[pl.ds(bh, TR, stride=BS), :]               # (TR, W)
        # One MXU pass per phase: LHS streams once, all 4 bw groups at once.
        y = jnp.dot(xb, s, preferred_element_type=jnp.float32,
                    precision=precision)                       # (TR, 4*Wo)
        for bw in range(BS):
            o_ref[BS * bh + bw] = y[:, bw * Wo:(bw + 1) * Wo].astype(o_ref.dtype)


def _row_tile(n_rows, w, itemsize):
    """Rows (of C*Ho) per block: ~4 MiB input blocks, dtype sublane multiple."""
    mult = max(8, 32 // itemsize)                 # 8 f32 / 16 bf16 / 32 int8-fp8
    target = (4 << 20) // max(1, BS * w * itemsize)
    if n_rows <= max(target, mult):
        return n_rows                             # full axis: always a legal block
    return max(mult, (target // mult) * mult)


@functools.partial(jax.jit, static_argnames=("block_size", "row_tile"))
def space_to_depth(x, block_size=4, row_tile=None):
    assert block_size == BS
    N, C, H, W = x.shape
    assert H % BS == 0 and W % BS == 0
    assert jnp.issubdtype(x.dtype, jnp.floating), "MXU selection path is float-only"
    Ho, Wo = H // BS, W // BS
    R = C * Ho                                    # fused (channel, out-row) axis
    itemsize = jnp.dtype(x.dtype).itemsize

    # Free row-major view: row index 4*r + bh, with r = c*Ho + ho.
    xr = x.reshape(N, BS * R, W)

    TR = row_tile if row_tile is not None else _row_tile(R, W, itemsize)
    n_rt = pl.cdiv(R, TR)

    # Explicit VMEM budget (v7x physical VMEM is 64 MiB; keep well under).
    in_block = BS * TR * W * itemsize
    out_block = BS * BS * TR * Wo * itemsize
    s_bytes = W * W * itemsize
    y_bytes = TR * W * 4
    vmem_est = 2 * in_block + 2 * out_block + s_bytes + 2 * y_bytes
    vmem_limit = int(min(max(vmem_est + (8 << 20), 32 << 20), 48 << 20))

    # For f32, force full-precision MXU passes so the 0/1 selection is exact
    # (default precision could round the LHS to bf16).
    precision = jax.lax.Precision.HIGHEST if x.dtype == jnp.float32 else None

    out = pl.pallas_call(
        functools.partial(space_to_depth_kernel, precision=precision),
        out_shape=jax.ShapeDtypeStruct((N, BS * BS, R, Wo), x.dtype),
        grid_spec=pltpu.PrefetchScalarGridSpec(
            num_scalar_prefetch=0,
            grid=(N, n_rt),
            in_specs=[
                pl.BlockSpec((None, BS * TR, W), lambda n, r: (n, r, 0)),
            ],
            out_specs=pl.BlockSpec((None, BS * BS, TR, Wo),
                                   lambda n, r: (n, 0, r, 0)),
        ),
        compiler_params=pltpu.CompilerParams(
            dimension_semantics=("parallel", "parallel"),
            vmem_limit_bytes=vmem_limit),
        cost_estimate=pl.CostEstimate(
            flops=2 * N * C * H * W * W,
            transcendentals=0,
            bytes_accessed=2 * N * C * H * W * itemsize),
    )(xr)

    # Free view back to the PyTorch layout: channel = (bh*4 + bw)*C + c.
    return out.reshape(N, C * BS * BS, Ho, Wo)


def ref_space_to_depth(x):
    # Pure-JAX reference mirroring the PyTorch forward exactly.
    N, C, H, W = x.shape
    xr = x.reshape(N, C, H // BS, BS, W // BS, BS)
    xr = jnp.transpose(xr, (0, 3, 5, 1, 2, 4))
    return xr.reshape(N, C * BS * BS, H // BS, W // BS)


if __name__ == "__main__":
    key = jax.random.PRNGKey(0)

    # Small shape implied by the module: (N, C, H, W) = (2, 4, 16, 16).
    x = jax.random.normal(key, (2, 4, 16, 16), dtype=jnp.float32)
    out = jax.block_until_ready(space_to_depth(x))
    ref = ref_space_to_depth(x)
    assert out.shape == (2, 64, 4, 4), out.shape
    assert out.dtype == x.dtype
    # Tight tolerance: catches any bf16 truncation of the f32 inputs.
    assert jnp.allclose(out, ref, rtol=1e-6, atol=1e-7), "mismatch vs reference"

    # Exercise row tiling + a ragged last tile (R = 5*4 = 20, TR = 8 -> 3 tiles).
    x2 = jax.random.normal(jax.random.PRNGKey(1), (1, 5, 16, 32), dtype=jnp.float32)
    out2 = jax.block_until_ready(space_to_depth(x2, row_tile=8))
    assert jnp.allclose(out2, ref_space_to_depth(x2), rtol=1e-6, atol=1e-7)

    print("KERNEL_OK")
</pallas_src>

<mosaic_0001>
module attributes {stable_mosaic.version = 11 : i64} {
  func.func @space_to_depth_kernel(%arg0: i32, %arg1: i32, %arg2: memref<1x64x16xf32, #tpu.memory_space<vmem>>, %arg3: memref<1x16x16x4xf32, #tpu.memory_space<vmem>>) attributes {dimension_semantics = [#tpu.dimension_semantics<parallel>, #tpu.dimension_semantics<parallel>], iteration_bounds = array<i64: 2, 1>, scalar_prefetch = 0 : i64, scratch_operands = 0 : i64, tpu.core_type = #tpu.core_type<tc>, window_params = [{transform_indices = @transform_0, window_bounds = array<i64: 1, 64, 16>}, {transform_indices = @transform_1, window_bounds = array<i64: 1, 16, 16, 4>}]} {
    %0 = tpu.iota {dimensions = array<i32: 0>} : vector<16x16xi32>
    %1 = tpu.iota {dimensions = array<i32: 1>} : vector<16x16xi32>
    %c3_i32 = arith.constant 3 : i32
    %2 = vector.broadcast %c3_i32 : i32 to vector<16x16xi32>
    %3 = arith.andi %0, %2 : vector<16x16xi32>
    %c4_i32 = arith.constant 4 : i32
    %4 = vector.broadcast %c4_i32 : i32 to vector<16x16xi32>
    %5 = arith.muli %3, %4 : vector<16x16xi32>
    %c2_i32 = arith.constant 2 : i32
    %6 = vector.broadcast %c2_i32 : i32 to vector<16x16xi32>
    %7 = arith.shrsi %0, %6 : vector<16x16xi32>
    %8 = arith.addi %5, %7 : vector<16x16xi32>
    %9 = arith.cmpi eq, %1, %8 : vector<16x16xi32>
    %cst = arith.constant 1.000000e+00 : f32
    %cst_0 = arith.constant 0.000000e+00 : f32
    %10 = vector.broadcast %cst : f32 to vector<16x16xf32>
    %11 = vector.broadcast %cst_0 : f32 to vector<16x16xf32>
    %12 = arith.select %9, %10, %11 : vector<16x16xi1>, vector<16x16xf32>
    %c0 = arith.constant 0 : index
    %c0_1 = arith.constant 0 : index
    %c0_2 = arith.constant 0 : index
    %13 = tpu.strided_load %arg2[%c0, %c0_1, %c0_2] {strides = array<i32: 1, 4, 1>} : memref<1x64x16xf32, #tpu.memory_space<vmem>>, vector<1x16x16xf32>
    %14 = vector.shape_cast %13 : vector<1x16x16xf32> to vector<16x16xf32>
    %cst_3 = arith.constant dense<0.000000e+00> : vector<16x16xf32>
    %15 = tpu.matmul %14, %12, %cst_3 {dimension_numbers = #tpu.dot_dimension_numbers<[1], [0], [0], [1], [0, 0, 1, 1], [], []>, precision = #tpu.contract_precision<fp32>} : vector<16x16xf32>, vector<16x16xf32>, vector<16x16xf32> -> vector<16x16xf32>
    %16 = vector.extract_strided_slice %15 {offsets = [0, 0], sizes = [16, 4], strides = [1, 1]} : vector<16x16xf32> to vector<16x4xf32>
    %c0_4 = arith.constant 0 : index
    %c0_5 = arith.constant 0 : index
    %c0_6 = arith.constant 0 : index
    %c0_7 = arith.constant 0 : index
    %17 = vector.load %arg3[%c0_4, %c0_5, %c0_6, %c0_7] : memref<1x16x16x4xf32, #tpu.memory_space<vmem>>, vector<1x1x16x4xf32>
    %18 = vector.shape_cast %17 : vector<1x1x16x4xf32> to vector<16x4xf32>
    %19 = vector.shape_cast %16 : vector<16x4xf32> to vector<1x1x16x4xf32>
    tpu.vector_store %arg3[%c0_4, %c0_5, %c0_6, %c0_7], %19 {strides = array<i32>} : memref<1x16x16x4xf32, #tpu.memory_space<vmem>>, vector<1x1x16x4xf32>,
    %20 = vector.extract_strided_slice %15 {offsets = [0, 4], sizes = [16, 4], strides = [1, 1]} : vector<16x16xf32> to vector<16x4xf32>
    %c0_8 = arith.constant 0 : index
    %c1 = arith.constant 1 : index
    %c0_9 = arith.constant 0 : index
    %c0_10 = arith.constant 0 : index
    %21 = vector.load %arg3[%c0_8, %c1, %c0_9, %c0_10] : memref<1x16x16x4xf32, #tpu.memory_space<vmem>>, vector<1x1x16x4xf32>
    %22 = vector.shape_cast %21 : vector<1x1x16x4xf32> to vector<16x4xf32>
    %23 = vector.shape_cast %20 : vector<16x4xf32> to vector<1x1x16x4xf32>
    tpu.vector_store %arg3[%c0_8, %c1, %c0_9, %c0_10], %23 {strides = array<i32>} : memref<1x16x16x4xf32, #tpu.memory_space<vmem>>, vector<1x1x16x4xf32>,
    %24 = vector.extract_strided_slice %15 {offsets = [0, 8], sizes = [16, 4], strides = [1, 1]} : vector<16x16xf32> to vector<16x4xf32>
    %c0_11 = arith.constant 0 : index
    %c2 = arith.constant 2 : index
    %c0_12 = arith.constant 0 : index
    %c0_13 = arith.constant 0 : index
    %25 = vector.load %arg3[%c0_11, %c2, %c0_12, %c0_13] : memref<1x16x16x4xf32, #tpu.memory_space<vmem>>, vector<1x1x16x4xf32>
    %26 = vector.shape_cast %25 : vector<1x1x16x4xf32> to vector<16x4xf32>
    %27 = vector.shape_cast %24 : vector<16x4xf32> to vector<1x1x16x4xf32>
    tpu.vector_store %arg3[%c0_11, %c2, %c0_12, %c0_13], %27 {strides = array<i32>} : memref<1x16x16x4xf32, #tpu.memory_space<vmem>>, vector<1x1x16x4xf32>,
    %28 = vector.extract_strided_slice %15 {offsets = [0, 12], sizes = [16, 4], strides = [1, 1]} : vector<16x16xf32> to vector<16x4xf32>
    %c0_14 = arith.constant 0 : index
    %c3 = arith.constant 3 : index
    %c0_15 = arith.constant 0 : index
    %c0_16 = arith.constant 0 : index
    %29 = vector.load %arg3[%c0_14, %c3, %c0_15, %c0_16] : memref<1x16x16x4xf32, #tpu.memory_space<vmem>>, vector<1x1x16x4xf32>
    %30 = vector.shape_cast %29 : vector<1x1x16x4xf32> to vector<16x4xf32>
    %31 = vector.shape_cast %28 : vector<16x4xf32> to vector<1x1x16x4xf32>
    tpu.vector_store %arg3[%c0_14, %c3, %c0_15, %c0_16], %31 {strides = array<i32>} : memref<1x16x16x4xf32, #tpu.memory_space<vmem>>, vector<1x1x16x4xf32>,
    %c0_17 = arith.constant 0 : index
    %c1_18 = arith.constant 1 : index
    %c0_19 = arith.constant 0 : index
    %32 = tpu.strided_load %arg2[%c0_17, %c1_18, %c0_19] {strides = array<i32: 1, 4, 1>} : memref<1x64x16xf32, #tpu.memory_space<vmem>>, vector<1x16x16xf32>
    %33 = vector.shape_cast %32 : vector<1x16x16xf32> to vector<16x16xf32>
    %cst_20 = arith.constant dense<0.000000e+00> : vector<16x16xf32>
    %34 = tpu.matmul %33, %12, %cst_20 {dimension_numbers = #tpu.dot_dimension_numbers<[1], [0], [0], [1], [0, 0, 1, 1], [], []>, precision = #tpu.contract_precision<fp32>} : vector<16x16xf32>, vector<16x16xf32>, vector<16x16xf32> -> vector<16x16xf32>
    %35 = vector.extract_strided_slice %34 {offsets = [0, 0], sizes = [16, 4], strides = [1, 1]} : vector<16x16xf32> to vector<16x4xf32>
    %c0_21 = arith.constant 0 : index
    %c4 = arith.constant 4 : index
    %c0_22 = arith.constant 0 : index
    %c0_23 = arith.constant 0 : index
    %36 = vector.load %arg3[%c0_21, %c4, %c0_22, %c0_23] : memref<1x16x16x4xf32, #tpu.memory_space<vmem>>, vector<1x1x16x4xf32>
    %37 = vector.shape_cast %36 : vector<1x1x16x4xf32> to vector<16x4xf32>
    %38 = vector.shape_cast %35 : vector<16x4xf32> to vector<1x1x16x4xf32>
    tpu.vector_store %arg3[%c0_21, %c4, %c0_22, %c0_23], %38 {strides = array<i32>} : memref<1x16x16x4xf32, #tpu.memory_space<vmem>>, vector<1x1x16x4xf32>,
    %39 = vector.extract_strided_slice %34 {offsets = [0, 4], sizes = [16, 4], strides = [1, 1]} : vector<16x16xf32> to vector<16x4xf32>
    %c0_24 = arith.constant 0 : index
    %c5 = arith.constant 5 : index
    %c0_25 = arith.constant 0 : index
    %c0_26 = arith.constant 0 : index
    %40 = vector.load %arg3[%c0_24, %c5, %c0_25, %c0_26] : memref<1x16x16x4xf32, #tpu.memory_space<vmem>>, vector<1x1x16x4xf32>
    %41 = vector.shape_cast %40 : vector<1x1x16x4xf32> to vector<16x4xf32>
    %42 = vector.shape_cast %39 : vector<16x4xf32> to vector<1x1x16x4xf32>
    tpu.vector_store %arg3[%c0_24, %c5, %c0_25, %c0_26], %42 {strides = array<i32>} : memref<1x16x16x4xf32, #tpu.memory_space<vmem>>, vector<1x1x16x4xf32>,
    %43 = vector.extract_strided_slice %34 {offsets = [0, 8], sizes = [16, 4], strides = [1, 1]} : vector<16x16xf32> to vector<16x4xf32>
    %c0_27 = arith.constant 0 : index
    %c6 = arith.constant 6 : index
    %c0_28 = arith.constant 0 : index
    %c0_29 = arith.constant 0 : index
    %44 = vector.load %arg3[%c0_27, %c6, %c0_28, %c0_29] : memref<1x16x16x4xf32, #tpu.memory_space<vmem>>, vector<1x1x16x4xf32>
    %45 = vector.shape_cast %44 : vector<1x1x16x4xf32> to vector<16x4xf32>
    %46 = vector.shape_cast %43 : vector<16x4xf32> to vector<1x1x16x4xf32>
    tpu.vector_store %arg3[%c0_27, %c6, %c0_28, %c0_29], %46 {strides = array<i32>} : memref<1x16x16x4xf32, #tpu.memory_space<vmem>>, vector<1x1x16x4xf32>,
    %47 = vector.extract_strided_slice %34 {offsets = [0, 12], sizes = [16, 4], strides = [1, 1]} : vector<16x16xf32> to vector<16x4xf32>
    %c0_30 = arith.constant 0 : index
    %c7 = arith.constant 7 : index
    %c0_31 = arith.constant 0 : index
    %c0_32 = arith.constant 0 : index
    %48 = vector.load %arg3[%c0_30, %c7, %c0_31, %c0_32] : memref<1x16x16x4xf32, #tpu.memory_space<vmem>>, vector<1x1x16x4xf32>
    %49 = vector.shape_cast %48 : vector<1x1x16x4xf32> to vector<16x4xf32>
    %50 = vector.shape_cast %47 : vector<16x4xf32> to vector<1x1x16x4xf32>
    tpu.vector_store %arg3[%c0_30, %c7, %c0_31, %c0_32], %50 {strides = array<i32>} : memref<1x16x16x4xf32, #tpu.memory_space<vmem>>, vector<1x1x16x4xf32>,
    %c0_33 = arith.constant 0 : index
    %c2_34 = arith.constant 2 : index
    %c0_35 = arith.constant 0 : index
    %51 = tpu.strided_load %arg2[%c0_33, %c2_34, %c0_35] {strides = array<i32: 1, 4, 1>} : memref<1x64x16xf32, #tpu.memory_space<vmem>>, vector<1x16x16xf32>
    %52 = vector.shape_cast %51 : vector<1x16x16xf32> to vector<16x16xf32>
    %cst_36 = arith.constant dense<0.000000e+00> : vector<16x16xf32>
    %53 = tpu.matmul %52, %12, %cst_36 {dimension_numbers = #tpu.dot_dimension_numbers<[1], [0], [0], [1], [0, 0, 1, 1], [], []>, precision = #tpu.contract_precision<fp32>} : vector<16x16xf32>, vector<16x16xf32>, vector<16x16xf32> -> vector<16x16xf32>
    %54 = vector.extract_strided_slice %53 {offsets = [0, 0], sizes = [16, 4], strides = [1, 1]} : vector<16x16xf32> to vector<16x4xf32>
    %c0_37 = arith.constant 0 : index
    %c8 = arith.constant 8 : index
    %c0_38 = arith.constant 0 : index
    %c0_39 = arith.constant 0 : index
    %55 = vector.load %arg3[%c0_37, %c8, %c0_38, %c0_39] : memref<1x16x16x4xf32, #tpu.memory_space<vmem>>, vector<1x1x16x4xf32>
    %56 = vector.shape_cast %55 : vector<1x1x16x4xf32> to vector<16x4xf32>
    %57 = vector.shape_cast %54 : vector<16x4xf32> to vector<1x1x16x4xf32>
    tpu.vector_store %arg3[%c0_37, %c8, %c0_38, %c0_39], %57 {strides = array<i32>} : memref<1x16x16x4xf32, #tpu.memory_space<vmem>>, vector<1x1x16x4xf32>,
    %58 = vector.extract_strided_slice %53 {offsets = [0, 4], sizes = [16, 4], strides = [1, 1]} : vector<16x16xf32> to vector<16x4xf32>
    %c0_40 = arith.constant 0 : index
    %c9 = arith.constant 9 : index
    %c0_41 = arith.constant 0 : index
    %c0_42 = arith.constant 0 : index
    %59 = vector.load %arg3[%c0_40, %c9, %c0_41, %c0_42] : memref<1x16x16x4xf32, #tpu.memory_space<vmem>>, vector<1x1x16x4xf32>
    %60 = vector.shape_cast %59 : vector<1x1x16x4xf32> to vector<16x4xf32>
    %61 = vector.shape_cast %58 : vector<16x4xf32> to vector<1x1x16x4xf32>
    tpu.vector_store %arg3[%c0_40, %c9, %c0_41, %c0_42], %61 {strides = array<i32>} : memref<1x16x16x4xf32, #tpu.memory_space<vmem>>, vector<1x1x16x4xf32>,
    %62 = vector.extract_strided_slice %53 {offsets = [0, 8], sizes = [16, 4], strides = [1, 1]} : vector<16x16xf32> to vector<16x4xf32>
    %c0_43 = arith.constant 0 : index
    %c10 = arith.constant 10 : index
    %c0_44 = arith.constant 0 : index
    %c0_45 = arith.constant 0 : index
    %63 = vector.load %arg3[%c0_43, %c10, %c0_44, %c0_45] : memref<1x16x16x4xf32, #tpu.memory_space<vmem>>, vector<1x1x16x4xf32>
    %64 = vector.shape_cast %63 : vector<1x1x16x4xf32> to vector<16x4xf32>
    %65 = vector.shape_cast %62 : vector<16x4xf32> to vector<1x1x16x4xf32>
    tpu.vector_store %arg3[%c0_43, %c10, %c0_44, %c0_45], %65 {strides = array<i32>} : memref<1x16x16x4xf32, #tpu.memory_space<vmem>>, vector<1x1x16x4xf32>,
    %66 = vector.extract_strided_slice %53 {offsets = [0, 12], sizes = [16, 4], strides = [1, 1]} : vector<16x16xf32> to vector<16x4xf32>
    %c0_46 = arith.constant 0 : index
    %c11 = arith.constant 11 : index
    %c0_47 = arith.constant 0 : index
    %c0_48 = arith.constant 0 : index
    %67 = vector.load %arg3[%c0_46, %c11, %c0_47, %c0_48] : memref<1x16x16x4xf32, #tpu.memory_space<vmem>>, vector<1x1x16x4xf32>
    %68 = vector.shape_cast %67 : vector<1x1x16x4xf32> to vector<16x4xf32>
    %69 = vector.shape_cast %66 : vector<16x4xf32> to vector<1x1x16x4xf32>
    tpu.vector_store %arg3[%c0_46, %c11, %c0_47, %c0_48], %69 {strides = array<i32>} : memref<1x16x16x4xf32, #tpu.memory_space<vmem>>, vector<1x1x16x4xf32>,
    %c0_49 = arith.constant 0 : index
    %c3_50 = arith.constant 3 : index
    %c0_51 = arith.constant 0 : index
    %70 = tpu.strided_load %arg2[%c0_49, %c3_50, %c0_51] {strides = array<i32: 1, 4, 1>} : memref<1x64x16xf32, #tpu.memory_space<vmem>>, vector<1x16x16xf32>
    %71 = vector.shape_cast %70 : vector<1x16x16xf32> to vector<16x16xf32>
    %cst_52 = arith.constant dense<0.000000e+00> : vector<16x16xf32>
    %72 = tpu.matmul %71, %12, %cst_52 {dimension_numbers = #tpu.dot_dimension_numbers<[1], [0], [0], [1], [0, 0, 1, 1], [], []>, precision = #tpu.contract_precision<fp32>} : vector<16x16xf32>, vector<16x16xf32>, vector<16x16xf32> -> vector<16x16xf32>
    %73 = vector.extract_strided_slice %72 {offsets = [0, 0], sizes = [16, 4], strides = [1, 1]} : vector<16x16xf32> to vector<16x4xf32>
    %c0_53 = arith.constant 0 : index
    %c12 = arith.constant 12 : index
    %c0_54 = arith.constant 0 : index
    %c0_55 = arith.constant 0 : index
    %74 = vector.load %arg3[%c0_53, %c12, %c0_54, %c0_55] : memref<1x16x16x4xf32, #tpu.memory_space<vmem>>, vector<1x1x16x4xf32>
    %75 = vector.shape_cast %74 : vector<1x1x16x4xf32> to vector<16x4xf32>
    %76 = vector.shape_cast %73 : vector<16x4xf32> to vector<1x1x16x4xf32>
    tpu.vector_store %arg3[%c0_53, %c12, %c0_54, %c0_55], %76 {strides = array<i32>} : memref<1x16x16x4xf32, #tpu.memory_space<vmem>>, vector<1x1x16x4xf32>,
    %77 = vector.extract_strided_slice %72 {offsets = [0, 4], sizes = [16, 4], strides = [1, 1]} : vector<16x16xf32> to vector<16x4xf32>
    %c0_56 = arith.constant 0 : index
    %c13 = arith.constant 13 : index
    %c0_57 = arith.constant 0 : index
    %c0_58 = arith.constant 0 : index
    %78 = vector.load %arg3[%c0_56, %c13, %c0_57, %c0_58] : memref<1x16x16x4xf32, #tpu.memory_space<vmem>>, vector<1x1x16x4xf32>
    %79 = vector.shape_cast %78 : vector<1x1x16x4xf32> to vector<16x4xf32>
    %80 = vector.shape_cast %77 : vector<16x4xf32> to vector<1x1x16x4xf32>
    tpu.vector_store %arg3[%c0_56, %c13, %c0_57, %c0_58], %80 {strides = array<i32>} : memref<1x16x16x4xf32, #tpu.memory_space<vmem>>, vector<1x1x16x4xf32>,
    %81 = vector.extract_strided_slice %72 {offsets = [0, 8], sizes = [16, 4], strides = [1, 1]} : vector<16x16xf32> to vector<16x4xf32>
    %c0_59 = arith.constant 0 : index
    %c14 = arith.constant 14 : index
    %c0_60 = arith.constant 0 : index
    %c0_61 = arith.constant 0 : index
    %82 = vector.load %arg3[%c0_59, %c14, %c0_60, %c0_61] : memref<1x16x16x4xf32, #tpu.memory_space<vmem>>, vector<1x1x16x4xf32>
    %83 = vector.shape_cast %82 : vector<1x1x16x4xf32> to vector<16x4xf32>
    %84 = vector.shape_cast %81 : vector<16x4xf32> to vector<1x1x16x4xf32>
    tpu.vector_store %arg3[%c0_59, %c14, %c0_60, %c0_61], %84 {strides = array<i32>} : memref<1x16x16x4xf32, #tpu.memory_space<vmem>>, vector<1x1x16x4xf32>,
    %85 = vector.extract_strided_slice %72 {offsets = [0, 12], sizes = [16, 4], strides = [1, 1]} : vector<16x16xf32> to vector<16x4xf32>
    %c0_62 = arith.constant 0 : index
    %c15 = arith.constant 15 : index
    %c0_63 = arith.constant 0 : index
    %c0_64 = arith.constant 0 : index
    %86 = vector.load %arg3[%c0_62, %c15, %c0_63, %c0_64] : memref<1x16x16x4xf32, #tpu.memory_space<vmem>>, vector<1x1x16x4xf32>
    %87 = vector.shape_cast %86 : vector<1x1x16x4xf32> to vector<16x4xf32>
    %88 = vector.shape_cast %85 : vector<16x4xf32> to vector<1x1x16x4xf32>
    tpu.vector_store %arg3[%c0_62, %c15, %c0_63, %c0_64], %88 {strides = array<i32>} : memref<1x16x16x4xf32, #tpu.memory_space<vmem>>, vector<1x1x16x4xf32>,
    return
  }
  func.func @transform_0(%arg0: i32, %arg1: i32) -> (i32, i32, i32) {
    %c0_i32 = arith.constant 0 : i32
    %c0_i32_0 = arith.constant 0 : i32
    return %arg0, %arg1, %c0_i32 : i32, i32, i32
  }
  func.func @transform_1(%arg0: i32, %arg1: i32) -> (i32, i32, i32, i32) {
    %c0_i32 = arith.constant 0 : i32
    %c0_i32_0 = arith.constant 0 : i32
    %c0_i32_1 = arith.constant 0 : i32
    return %arg0, %c0_i32, %arg1, %c0_i32_0 : i32, i32, i32, i32
  }
}

</mosaic_0001>

<llo_original>
// kernel: space_to_depth.1
$region0: #{space_to_depth.1}
  #allocation0 [shape = 'u32[]', space=smem, size = 0x4, offset = 0x4, fixed_abs, tag = 'smem constant byte address 0x4 - core index']
  #allocation1 [shape = 'u32[144,128]{1,0:T(1,128)}', space=vmem, size = 0x12000, scoped, tag = 'internal scratch']
  %s0 = inlined_call_operand.hbm [shape: f32[2,64,16], index: 0, kind: input, shape index: {}]
  %s1 = inlined_call_operand.vmem [shape: f32[2,16,16,4], index: 1, kind: output, shape index: {}]
  %s2 = sld [smem:[#allocation0]]
  $region41: #{space_to_depth.1} parent=0
    _
  %s4 = ssub.s32 1, %s2
  %s5 = scalar_select 0, %s4, %s2
  $region1: #{space_to_depth.1} parent=0
    #allocation2 [shape = 'u8[65536]{0}', space=vmem, size = 0x10000, scoped, tag = 'input window, operand 0']
    #allocation3 [shape = 's32[2]{0}', space=sflag, size = 0x8, scoped, tag = 'scoped memory for space_to_depth.1']
    %6 = vsyncpa [#allocation3], 0
    %s7 = scalar_lea.sflag [#allocation3], 1
    %8 = vsyncpa %s7, 0
    loop: start=0, step=1, limit=4
    $region2: #{space_to_depth.1} parent=1 // loop_pre_header
      _
    $region3: #{space_to_depth.1} parent=1 // loop_header
      %s10 = sphi 0, %s14
      %p11 = scmp.ge.s32.totalorder %s10, 4
      %s17 = sphi 0, %s29
      %s18 = sphi 0, %s25
      %s19 = sphi 0, %s17
      %s20 = sphi 0, %s18
      %s21 = sphi 0, %s19
      %s22 = sphi 0, %s20
      %s34 = sphi 0, %s36
      %s37 = sphi 0, %s34
      %s38 = sphi 0, %s37
      %s54 = sphi 0, %s38
      %s62 = sphi 0, %s64
      %s65 = sphi 0, %s62
      %s66 = sphi 0, %s65
      %s82 = sphi 0, %s66
    $region4: #{space_to_depth.1} parent=1 // loop_header_branch
      %13 = sbr.rel (%p11) target = $region8
    $region5: #{space_to_depth.1} parent=1 // loop_body
      %s15 = ssub.s32 %s10, 1
      %s16 = ssub.s32 %s10, 2
      %s23 = sadd.s32 1, %s18
      %p24 = scmp.ge.s32.totalorder %s23, 1
      %s25 = scalar_select %p24, 0, %s23
      %s26 = sadd.s32 1, %s17
      %s27 = scalar_select %p24, %s26, %s17
      %p28 = scmp.ge.s32.totalorder %s27, 2
      %s29 = scalar_select %p28, 0, %s27
      %s30 = ssub.s32 %s17, %s29
      %s31 = ssub.s32 %s18, %s25
      %s32 = sor.u32 %s30, %s31
      %p33 = scmp.eq.s32.totalorder %s32, 0
      %s35 = sadd.s32 %s34, 1
      %s36 = scalar_select %p33, %s34, %s35
      %p39 = pneg %p33
      %p40 = scmp.eq.s32.totalorder %s10, 1
      %p41 = por %p39, %p40
      %p42 = scmp.ne.s32.totalorder %s34, %s37
      %p43 = scmp.eq.s32.totalorder %s10, 0
      %p44 = por %p42, %p43
      %p45 = scmp.ne.s32.totalorder %s34, %s37
      %p46 = scmp.eq.s32.totalorder %s15, 1
      %p47 = por %p45, %p46
      %p48 = scmp.ne.s32.totalorder %s37, %s38
      %p49 = scmp.eq.s32.totalorder %s15, 0
      %p50 = por %p48, %p49
      %p51 = scmp.ne.s32.totalorder %s37, %s38
      %p52 = scmp.eq.s32.totalorder %s16, 1
      %p53 = por %p51, %p52
      %p55 = scmp.ne.s32.totalorder %s38, %s54
      %p56 = scmp.eq.s32.totalorder %s16, 0
      %p57 = por %p55, %p56
      %s58 = ssub.s32 %s17, %s29
      %s59 = ssub.s32 %s18, %s25
      %s60 = sor.u32 %s58, %s59
      %p61 = scmp.eq.s32.totalorder %s60, 0
      %s63 = sadd.s32 %s62, 1
      %s64 = scalar_select %p61, %s62, %s63
      %p67 = pneg %p61
      %p68 = scmp.eq.s32.totalorder %s10, 1
      %p69 = por %p67, %p68
      %p70 = scmp.ne.s32.totalorder %s62, %s65
      %p71 = scmp.eq.s32.totalorder %s10, 0
      %p72 = por %p70, %p71
      %p73 = scmp.ne.s32.totalorder %s62, %s65
      %p74 = scmp.eq.s32.totalorder %s15, 1
      %p75 = por %p73, %p74
      %p76 = scmp.ne.s32.totalorder %s65, %s66
      %p77 = scmp.eq.s32.totalorder %s15, 0
      %p78 = por %p76, %p77
      %p79 = scmp.ne.s32.totalorder %s65, %s66
      %p80 = scmp.eq.s32.totalorder %s16, 1
      %p81 = por %p79, %p80
      %p83 = scmp.ne.s32.totalorder %s66, %s82
      %p84 = scmp.eq.s32.totalorder %s16, 0
      %p85 = por %p83, %p84
      %p86 = scmp.le.s32.totalorder 1, %s10
      %p87 = scmp.lt.s32.totalorder %s10, 3
      %p88 = pnand %p86, %p87
      %p89 = pneg %p88
      // Predicated region
      $region9: #{space_to_depth.1} parent=5 // pred_check
        _
      $region10: #{space_to_depth.1} parent=5 // pred_check_branch
        %91 = sbr.rel (%p88) target = $region12
      $region11: #{space_to_depth.1} parent=5 // pred_region
        %s92 = ssub.s32 %s10, 1
      $region12: #{space_to_depth.1} parent=5 // pred_fallthru
        _
      %p93 = scmp.lt.s32.totalorder %s10, 2
      // Predicated region
      $region13: #{space_to_depth.1} parent=5 // pred_check
        %p94 = pneg %p93
      $region14: #{space_to_depth.1} parent=5 // pred_check_branch
        %96 = sbr.rel (%p94) target = $region16
      $region15: #{space_to_depth.1} parent=5 // pred_region
        // Predicated region
        $region17: #{space_to_depth.1} parent=15 // pred_check
          %p97 = pneg %p44
        $region18: #{space_to_depth.1} parent=15 // pred_check_branch
          %99 = sbr.rel (%p97) target = $region20
        $region19: #{space_to_depth.1} parent=15 // pred_region
          %s100 = sand.u32 %s34, 1
          %s101 = scalar_lea.sflag [#allocation3], %s100
          %s102 = sand.u32 %s34, 1
          %s103 = smul.addr %s102, 64
          %s104 = scalar_lea.vmem [#allocation2], %s103
          %s105 = smul.u32 8, %s18
          %s107 = ssub.s32 1024, 1024
          %108 = vsyncadd %s101, %s107
          %s109 = smul.addr %s17, 8
          %s110 = sadd.s32 %s105, %s109
          %s111 = smul.addr %s110, 128
          %s112 = scalar_lea.hbm %s0, %s111
          %s113 = sshll.u32 %s104, 4
          %s114 = int_to_ptr.vmem [resolvable:$true] %s113
          %119 = dma.hbm_to_vmem [thread:$0]  %s112, 1024, %s114, %s101, 128, 128, 8
        $region20: #{space_to_depth.1} parent=15 // pred_fallthru
          _
      $region16: #{space_to_depth.1} parent=5 // pred_fallthru
        _
      %p120 = scmp.le.s32.totalorder 1, %s10
      %p121 = scmp.lt.s32.totalorder %s10, 3
      %p122 = pnand %p120, %p121
      %p123 = pneg %p122
      // Predicated region
      $region21: #{space_to_depth.1} parent=5 // pred_check
        _
      $region22: #{space_to_depth.1} parent=5 // pred_check_branch
        %125 = sbr.rel (%p122) target = $region24
      $region23: #{space_to_depth.1} parent=5 // pred_region
        %s126 = ssub.s32 %s10, 1
        %s127 = sand.u32 %s37, 1
        %s128 = scalar_lea.sflag [#allocation3], %s127
        %s129 = sand.u32 %s37, 1
        %s130 = smul.addr %s129, 64
        %s131 = scalar_lea.vmem [#allocation2], %s130
        // Predicated region
        $region25: #{space_to_depth.1} parent=23 // pred_check
          %p132 = pneg %p50
        $region26: #{space_to_depth.1} parent=23 // pred_check_branch
          %134 = sbr.rel (%p132) target = $region28
        $region27: #{space_to_depth.1} parent=23 // pred_region
          %135 = dma.done %s128, 1024
        $region28: #{space_to_depth.1} parent=23 // pred_fallthru
          _
        %s136 = sand.u32 %s37, 1
        %s137 = scalar_lea.sflag [#allocation3], %s136
        %s138 = sand.u32 %s37, 1
        %s139 = smul.addr %s138, 64
        %s140 = scalar_lea.vmem [#allocation2], %s139
        %p141 = pneg %p50
        %p142 = pneg %p47
        %p143 = pneg %p78
        %p144 = pneg %p75
        %s145 = smul.u32 2, %s20
        %p146 = scmp.lt.s32.totalorder %s19, 1
        %s147 = scalar_select %p146, %s19, 1
        %p148 = scmp.lt.s32.totalorder %s145, 1
        %s149 = scalar_select %p148, %s145, 1
        %s150 = smul.addr %s147, 32
        %s151 = sadd.s32 %s149, %s150
        %s152 = smul.addr %s151, 8
        %s153 = scalar_lea.vmem %s1, %s152
        %s154 = smul.u32 8, %s20
        %s155 = smul.u32 2, %s20
        %p156 = scmp.lt.s32.totalorder %s19, 1
        %s157 = scalar_select %p156, %s19, 1
        %p158 = scmp.lt.s32.totalorder %s155, 1
        %s159 = scalar_select %p158, %s155, 1
        %s160 = smul.addr %s157, 32
        %s161 = sadd.s32 %s159, %s160
        %s162 = smul.addr %s161, 8
        %s163 = scalar_lea.vmem %s1, %s162
        %s164 = smul.u32 2, %s20
        %v165 = vlaneseq
        %v166 = vshrl.u32 %v165, 7
        %v167 = vadd.s32 %v166, 8
        %v168 = vlaneseq
        %v169 = vand.u32 %v168, 127
        %v170 = vand.u32 %v166, 3
        %v171 = vand.u32 %v167, 3
        %v172 = vmul.u32 %v170, 4
        %v173 = vmul.u32 %v171, 4
        %v174 = vshra.s32 %v166, 2
        %v175 = vshra.s32 %v167, 2
        %v176 = vadd.s32 %v172, %v174
        %v177 = vadd.s32 %v173, %v175
        %vm178 = vcmp.eq.s32.totalorder %v169, %v176
        %vm179 = vcmp.eq.s32.totalorder %v169, %v177
        %v180 = vsel %vm178, 1.0, 0.0
        %v181 = vsel %vm179, 1.0, 0.0
        %v182 = vld [vmem:[%s131] ss:$4 sm:$0xff]
        %s183 = scalar_lea.vmem %s131, 32 [#allocation2]
        %v184 = vld [vmem:[%s183] ss:$4 sm:$0xff]
        %vm185 = vcmask 130048
        %v187 = vsel %vm185, %v182, 0
        %v190 = vsel %vm185, %v184, 0
        %192 = vmatprep.subr.mxu0 0.0
        %193 = vmatpush1.msra.mxu0 %v180
        %194 = vmatprep.subr.mxu0 0.0
        %195 = vmatpush1.msra.mxu0 %v181
        %196 = vmatprep.subr.mxu0 0.0
        %197 = vmatpush1.msra.mxu0 0.0
        %198 = vmatprep.subr.mxu0 0.0
        %199 = vmatpush1.msra.mxu0 0.0
        %200 = vmatprep.subr.mxu0 0.0
        %201 = vmatpush1.msra.mxu0 0.0
        %202 = vmatprep.subr.mxu0 0.0
        %203 = vmatpush1.msra.mxu0 0.0
        %204 = vmatprep.subr.mxu0 0.0
        %205 = vmatpush1.msra.mxu0 0.0
        %206 = vmatprep.subr.mxu0 0.0
        %207 = vmatpush1.msra.mxu0 0.0
        %208 = vmatprep.subr.mxu0 0.0
        %209 = vmatpush1.msra.mxu0 0.0
        %210 = vmatprep.subr.mxu0 0.0
        %211 = vmatpush1.msra.mxu0 0.0
        %212 = vmatprep.subr.mxu0 0.0
        %213 = vmatpush1.msra.mxu0 0.0
        %214 = vmatprep.subr.mxu0 0.0
        %215 = vmatpush1.msra.mxu0 0.0
        %216 = vmatprep.subr.mxu0 0.0
        %217 = vmatpush1.msra.mxu0 0.0
        %218 = vmatprep.subr.mxu0 0.0
        %219 = vmatpush1.msra.mxu0 0.0
        %220 = vmatprep.subr.mxu0 0.0
        %221 = vmatpush1.msra.mxu0 0.0
        %222 = vmatprep.subr.mxu0 0.0
        %223 = vmatpush1.msra.mxu0 0.0
        %224 = vmatprep.subr.mxu0 0.0
        %225 = vmatpush1.msra.mxu0 0.0
        %226 = vmatprep.subr.mxu0 0.0
        %227 = vmatpush1.msra.mxu0 0.0
        %228 = vmatprep.subr.mxu0 0.0
        %229 = vmatpush1.msra.mxu0 0.0
        %230 = vmatprep.subr.mxu0 0.0
        %231 = vmatpush1.msra.mxu0 0.0
        %232 = vmatprep.subr.mxu0 0.0
        %233 = vmatpush1.msra.mxu0 0.0
        %234 = vmatprep.subr.mxu0 0.0
        %235 = vmatpush1.msra.mxu0 0.0
        %236 = vmatprep.subr.mxu0 0.0
        %237 = vmatpush1.msra.mxu0 0.0
        %238 = vmatprep.subr.mxu0 0.0
        %239 = vmatpush1.msra.mxu0 0.0
        %240 = vmatprep.subr.mxu0 0.0
        %241 = vmatpush1.msra.mxu0 0.0
        %242 = vmatprep.subr.mxu0 0.0
        %243 = vmatpush1.msra.mxu0 0.0
        %244 = vmatprep.subr.mxu0 0.0
        %245 = vmatpush1.msra.mxu0 0.0
        %246 = vmatprep.subr.mxu0 0.0
        %247 = vmatpush1.msra.mxu0 0.0
        %248 = vmatprep.subr.mxu0 0.0
        %249 = vmatpush1.msra.mxu0 0.0
        %250 = vmatprep.subr.mxu0 0.0
        %251 = vmatpush1.msra.mxu0 0.0
        %252 = vmatprep.subr.mxu0 0.0
        %253 = vmatpush1.msra.mxu0 0.0
        %254 = vmatprep.subr.mxu0 0.0
        %255 = vmatpush1.msra.mxu0 0.0
        %256 = vmatprep.mubr.f32.mxu0 0.0
        %v257 = vand.u32 %v187, 4294901760
        %v258 = vsub.f32 %v187, %v257
        %v259 = vand.u32 %v258, 4294901760
        %v260 = vsub.f32 %v258, %v259
        %v261 = vand.u32 %v260, 4294901760
        %262 = vmatmul.mubr.f32.gmra.mrb[0].mxu0 %v261
        %v263 = vpop.f32.mrb[0].mxu0
        %v264 = vadd.f32 0.0, %v263
        %v265 = vpop.f32.mrb[0].mxu0
        %266 = vmatprep.mubr.f32.mxu0 0.0
        %v267 = vand.u32 %v190, 4294901760
        %v268 = vsub.f32 %v190, %v267
        %v269 = vand.u32 %v268, 4294901760
        %v270 = vsub.f32 %v268, %v269
        %v271 = vand.u32 %v270, 4294901760
        %272 = vmatmul.mubr.f32.gmra.mrb[0].mxu0 %v271
        %v273 = vpop.f32.mrb[0].mxu0
        %v274 = vadd.f32 0.0, %v273
        %v275 = vpop.f32.mrb[0].mxu0
        %276 = vdwg.mxu0
        %277 = vmatprep.subr.mxu0 0.0
        %v278 = vsub.f32 %v180, %v180
        %v279 = vand.u32 %v278, 4294901760
        %v280 = vsub.f32 %v278, %v279
        %v281 = vand.u32 %v280, 4294901760
        %282 = vmatpush1.msra.mxu0 %v281
        %283 = vmatprep.subr.mxu0 0.0
        %v284 = vsub.f32 %v181, %v181
        %v285 = vand.u32 %v284, 4294901760
        %v286 = vsub.f32 %v284, %v285
        %v287 = vand.u32 %v286, 4294901760
        %288 = vmatpush1.msra.mxu0 %v287
        %289 = vmatprep.subr.mxu0 0.0
        %290 = vmatpush1.msra.mxu0 0.0
        %291 = vmatprep.subr.mxu0 0.0
        %292 = vmatpush1.msra.mxu0 0.0
        %293 = vmatprep.subr.mxu0 0.0
        %294 = vmatpush1.msra.mxu0 0.0
        %295 = vmatprep.subr.mxu0 0.0
        %296 = vmatpush1.msra.mxu0 0.0
        %297 = vmatprep.subr.mxu0 0.0
        %298 = vmatpush1.msra.mxu0 0.0
        %299 = vmatprep.subr.mxu0 0.0
        %300 = vmatpush1.msra.mxu0 0.0
        %301 = vmatprep.subr.mxu0 0.0
        %302 = vmatpush1.msra.mxu0 0.0
        %303 = vmatprep.subr.mxu0 0.0
        %304 = vmatpush1.msra.mxu0 0.0
        %305 = vmatprep.subr.mxu0 0.0
        %306 = vmatpush1.msra.mxu0 0.0
        %307 = vmatprep.subr.mxu0 0.0
        %308 = vmatpush1.msra.mxu0 0.0
        %309 = vmatprep.subr.mxu0 0.0
        %310 = vmatpush1.msra.mxu0 0.0
        %311 = vmatprep.subr.mxu0 0.0
        %312 = vmatpush1.msra.mxu0 0.0
        %313 = vmatprep.subr.mxu0 0.0
        %314 = vmatpush1.msra.mxu0 0.0
        %315 = vmatprep.subr.mxu0 0.0
        %316 = vmatpush1.msra.mxu0 0.0
        %317 = vmatprep.subr.mxu0 0.0
        %318 = vmatpush1.msra.mxu0 0.0
        %319 = vmatprep.subr.mxu0 0.0
        %320 = vmatpush1.msra.mxu0 0.0
        %321 = vmatprep.subr.mxu0 0.0
        %322 = vmatpush1.msra.mxu0 0.0
        %323 = vmatprep.subr.mxu0 0.0
        %324 = vmatpush1.msra.mxu0 0.0
        %325 = vmatprep.subr.mxu0 0.0
        %326 = vmatpush1.msra.mxu0 0.0
        %327 = vmatprep.subr.mxu0 0.0
        %328 = vmatpush1.msra.mxu0 0.0
        %329 = vmatprep.subr.mxu0 0.0
        %330 = vmatpush1.msra.mxu0 0.0
        %331 = vmatprep.subr.mxu0 0.0
        %332 = vmatpush1.msra.mxu0 0.0
        %333 = vmatprep.subr.mxu0 0.0
        %334 = vmatpush1.msra.mxu0 0.0
        %335 = vmatprep.subr.mxu0 0.0
        %336 = vmatpush1.msra.mxu0 0.0
        %337 = vmatprep.subr.mxu0 0.0
        %338 = vmatpush1.msra.mxu0 0.0
        %339 = vmatprep.subr.mxu0 0.0
        %340 = vmatpush1.msra.mxu0 0.0
        %341 = vmatprep.subr.mxu0 0.0
        %342 = vmatpush1.msra.mxu0 0.0
        %343 = vmatprep.subr.mxu0 0.0
        %344 = vmatpush1.msra.mxu0 0.0
        %345 = vmatprep.subr.mxu0 0.0
        %346 = vmatpush1.msra.mxu0 0.0
        %347 = vmatprep.subr.mxu0 0.0
        %348 = vmatpush1.msra.mxu0 0.0
        %349 = vmatprep.mubr.f32.mxu0 0.0
        %v350 = vand.u32 %v187, 4294901760
        %351 = vmatmul.mubr.f32.gmra.mrb[0].mxu0 %v350
        %v352 = vpop.f32.mrb[0].mxu0
        %v353 = vadd.f32 %v264, %v352
        %v354 = vpop.f32.mrb[0].mxu0
        %355 = vmatprep.mubr.f32.mxu0 0.0
        %v356 = vand.u32 %v190, 4294901760
        %357 = vmatmul.mubr.f32.gmra.mrb[0].mxu0 %v356
        %v358 = vpop.f32.mrb[0].mxu0
        %v359 = vadd.f32 %v274, %v358
        %v360 = vpop.f32.mrb[0].mxu0
        %361 = vdwg.mxu0
        %362 = vmatprep.subr.mxu0 0.0
        %v363 = vsub.f32 %v180, %v180
        %364 = vmatpush1.msra.mxu0 %v363
        %365 = vmatprep.subr.mxu0 0.0
        %v366 = vsub.f32 %v181, %v181
        %367 = vmatpush1.msra.mxu0 %v366
        %368 = vmatprep.subr.mxu0 0.0
        %369 = vmatpush1.msra.mxu0 0.0
        %370 = vmatprep.subr.mxu0 0.0
        %371 = vmatpush1.msra.mxu0 0.0
        %372 = vmatprep.subr.mxu0 0.0
        %373 = vmatpush1.msra.mxu0 0.0
        %374 = vmatprep.subr.mxu0 0.0
        %375 = vmatpush1.msra.mxu0 0.0
        %376 = vmatprep.subr.mxu0 0.0
        %377 = vmatpush1.msra.mxu0 0.0
        %378 = vmatprep.subr.mxu0 0.0
        %379 = vmatpush1.msra.mxu0 0.0
        %380 = vmatprep.subr.mxu0 0.0
        %381 = vmatpush1.msra.mxu0 0.0
        %382 = vmatprep.subr.mxu0 0.0
        %383 = vmatpush1.msra.mxu0 0.0
        %384 = vmatprep.subr.mxu0 0.0
        %385 = vmatpush1.msra.mxu0 0.0
        %386 = vmatprep.subr.mxu0 0.0
        %387 = vmatpush1.msra.mxu0 0.0
        %388 = vmatprep.subr.mxu0 0.0
        %389 = vmatpush1.msra.mxu0 0.0
        %390 = vmatprep.subr.mxu0 0.0
        %391 = vmatpush1.msra.mxu0 0.0
        %392 = vmatprep.subr.mxu0 0.0
        %393 = vmatpush1.msra.mxu0 0.0
        %394 = vmatprep.subr.mxu0 0.0
        %395 = vmatpush1.msra.mxu0 0.0
        %396 = vmatprep.subr.mxu0 0.0
        %397 = vmatpush1.msra.mxu0 0.0
        %398 = vmatprep.subr.mxu0 0.0
        %399 = vmatpush1.msra.mxu0 0.0
        %400 = vmatprep.subr.mxu0 0.0
        %401 = vmatpush1.msra.mxu0 0.0
        %402 = vmatprep.subr.mxu0 0.0
        %403 = vmatpush1.msra.mxu0 0.0
        %404 = vmatprep.subr.mxu0 0.0
        %405 = vmatpush1.msra.mxu0 0.0
        %406 = vmatprep.subr.mxu0 0.0
        %407 = vmatpush1.msra.mxu0 0.0
        %408 = vmatprep.subr.mxu0 0.0
        %409 = vmatpush1.msra.mxu0 0.0
        %410 = vmatprep.subr.mxu0 0.0
        %411 = vmatpush1.msra.mxu0 0.0
        %412 = vmatprep.subr.mxu0 0.0
        %413 = vmatpush1.msra.mxu0 0.0
        %414 = vmatprep.subr.mxu0 0.0
        %415 = vmatpush1.msra.mxu0 0.0
        %416 = vmatprep.subr.mxu0 0.0
        %417 = vmatpush1.msra.mxu0 0.0
        %418 = vmatprep.subr.mxu0 0.0
        %419 = vmatpush1.msra.mxu0 0.0
        %420 = vmatprep.subr.mxu0 0.0
        %421 = vmatpush1.msra.mxu0 0.0
        %422 = vmatprep.subr.mxu0 0.0
        %423 = vmatpush1.msra.mxu0 0.0
        %424 = vmatprep.subr.mxu0 0.0
        %425 = vmatpush1.msra.mxu0 0.0
        %426 = vmatprep.subr.mxu0 0.0
        %427 = vmatpush1.msra.mxu0 0.0
        %428 = vmatprep.mubr.f32.mxu0 0.0
        %v429 = vand.u32 %v187, 4294901760
        %v430 = vsub.f32 %v187, %v429
        %431 = vmatmul.mubr.f32.gmra.mrb[0].mxu0 %v430
        %v432 = vpop.f32.mrb[0].mxu0
        %v433 = vadd.f32 %v353, %v432
        %v434 = vpop.f32.mrb[0].mxu0
        %435 = vmatprep.mubr.f32.mxu0 0.0
        %v436 = vand.u32 %v190, 4294901760
        %v437 = vsub.f32 %v190, %v436
        %438 = vmatmul.mubr.f32.gmra.mrb[0].mxu0 %v437
        %v439 = vpop.f32.mrb[0].mxu0
        %v440 = vadd.f32 %v359, %v439
        %v441 = vpop.f32.mrb[0].mxu0
        %442 = vdwg.mxu0
        %443 = vmatprep.subr.mxu0 0.0
        %444 = vmatpush1.msra.mxu0 %v180
        %445 = vmatprep.subr.mxu0 0.0
        %446 = vmatpush1.msra.mxu0 %v181
        %447 = vmatprep.subr.mxu0 0.0
        %448 = vmatpush1.msra.mxu0 0.0
        %449 = vmatprep.subr.mxu0 0.0
        %450 = vmatpush1.msra.mxu0 0.0
        %451 = vmatprep.subr.mxu0 0.0
        %452 = vmatpush1.msra.mxu0 0.0
        %453 = vmatprep.subr.mxu0 0.0
        %454 = vmatpush1.msra.mxu0 0.0
        %455 = vmatprep.subr.mxu0 0.0
        %456 = vmatpush1.msra.mxu0 0.0
        %457 = vmatprep.subr.mxu0 0.0
        %458 = vmatpush1.msra.mxu0 0.0
        %459 = vmatprep.subr.mxu0 0.0
        %460 = vmatpush1.msra.mxu0 0.0
        %461 = vmatprep.subr.mxu0 0.0
        %462 = vmatpush1.msra.mxu0 0.0
        %463 = vmatprep.subr.mxu0 0.0
        %464 = vmatpush1.msra.mxu0 0.0
        %465 = vmatprep.subr.mxu0 0.0
        %466 = vmatpush1.msra.mxu0 0.0
        %467 = vmatprep.subr.mxu0 0.0
        %468 = vmatpush1.msra.mxu0 0.0
        %469 = vmatprep.subr.mxu0 0.0
        %470 = vmatpush1.msra.mxu0 0.0
        %471 = vmatprep.subr.mxu0 0.0
        %472 = vmatpush1.msra.mxu0 0.0
        %473 = vmatprep.subr.mxu0 0.0
        %474 = vmatpush1.msra.mxu0 0.0
        %475 = vmatprep.subr.mxu0 0.0
        %476 = vmatpush1.msra.mxu0 0.0
        %477 = vmatprep.subr.mxu0 0.0
        %478 = vmatpush1.msra.mxu0 0.0
        %479 = vmatprep.subr.mxu0 0.0
        %480 = vmatpush1.msra.mxu0 0.0
        %481 = vmatprep.subr.mxu0 0.0
        %482 = vmatpush1.msra.mxu0 0.0
        %483 = vmatprep.subr.mxu0 0.0
        %484 = vmatpush1.msra.mxu0 0.0
        %485 = vmatprep.subr.mxu0 0.0
        %486 = vmatpush1.msra.mxu0 0.0
        %487 = vmatprep.subr.mxu0 0.0
        %488 = vmatpush1.msra.mxu0 0.0
        %489 = vmatprep.subr.mxu0 0.0
        %490 = vmatpush1.msra.mxu0 0.0
        %491 = vmatprep.subr.mxu0 0.0
        %492 = vmatpush1.msra.mxu0 0.0
        %493 = vmatprep.subr.mxu0 0.0
        %494 = vmatpush1.msra.mxu0 0.0
        %495 = vmatprep.subr.mxu0 0.0
        %496 = vmatpush1.msra.mxu0 0.0
        %497 = vmatprep.subr.mxu0 0.0
        %498 = vmatpush1.msra.mxu0 0.0
        %499 = vmatprep.subr.mxu0 0.0
        %500 = vmatpush1.msra.mxu0 0.0
        %501 = vmatprep.subr.mxu0 0.0
        %502 = vmatpush1.msra.mxu0 0.0
        %503 = vmatprep.subr.mxu0 0.0
        %504 = vmatpush1.msra.mxu0 0.0
        %505 = vmatprep.subr.mxu0 0.0
        %506 = vmatpush1.msra.mxu0 0.0
        %507 = vmatprep.mubr.f32.mxu0 0.0
        %v508 = vand.u32 %v187, 4294901760
        %v509 = vsub.f32 %v187, %v508
        %v510 = vand.u32 %v509, 4294901760
        %511 = vmatmul.mubr.f32.gmra.mrb[0].mxu0 %v510
        %v512 = vpop.f32.mrb[0].mxu0
        %v513 = vadd.f32 %v433, %v512
        %v514 = vpop.f32.mrb[0].mxu0
        %515 = vmatprep.mubr.f32.mxu0 0.0
        %v516 = vand.u32 %v190, 4294901760
        %v517 = vsub.f32 %v190, %v516
        %v518 = vand.u32 %v517, 4294901760
        %519 = vmatmul.mubr.f32.gmra.mrb[0].mxu0 %v518
        %v520 = vpop.f32.mrb[0].mxu0
        %v521 = vadd.f32 %v440, %v520
        %v522 = vpop.f32.mrb[0].mxu0
        %523 = vdwg.mxu0
        %524 = vmatprep.subr.mxu0 0.0
        %v525 = vsub.f32 %v180, %v180
        %v526 = vand.u32 %v525, 4294901760
        %527 = vmatpush1.msra.mxu0 %v526
        %528 = vmatprep.subr.mxu0 0.0
        %v529 = vsub.f32 %v181, %v181
        %v530 = vand.u32 %v529, 4294901760
        %531 = vmatpush1.msra.mxu0 %v530
        %532 = vmatprep.subr.mxu0 0.0
        %533 = vmatpush1.msra.mxu0 0.0
        %534 = vmatprep.subr.mxu0 0.0
        %535 = vmatpush1.msra.mxu0 0.0
        %536 = vmatprep.subr.mxu0 0.0
        %537 = vmatpush1.msra.mxu0 0.0
        %538 = vmatprep.subr.mxu0 0.0
        %539 = vmatpush1.msra.mxu0 0.0
        %540 = vmatprep.subr.mxu0 0.0
        %541 = vmatpush1.msra.mxu0 0.0
        %542 = vmatprep.subr.mxu0 0.0
        %543 = vmatpush1.msra.mxu0 0.0
        %544 = vmatprep.subr.mxu0 0.0
        %545 = vmatpush1.msra.mxu0 0.0
        %546 = vmatprep.subr.mxu0 0.0
        %547 = vmatpush1.msra.mxu0 0.0
        %548 = vmatprep.subr.mxu0 0.0
        %549 = vmatpush1.msra.mxu0 0.0
        %550 = vmatprep.subr.mxu0 0.0
        %551 = vmatpush1.msra.mxu0 0.0
        %552 = vmatprep.subr.mxu0 0.0
        %553 = vmatpush1.msra.mxu0 0.0
        %554 = vmatprep.subr.mxu0 0.0
        %555 = vmatpush1.msra.mxu0 0.0
        %556 = vmatprep.subr.mxu0 0.0
        %557 = vmatpush1.msra.mxu0 0.0
        %558 = vmatprep.subr.mxu0 0.0
        %559 = vmatpush1.msra.mxu0 0.0
        %560 = vmatprep.subr.mxu0 0.0
        %561 = vmatpush1.msra.mxu0 0.0
        %562 = vmatprep.subr.mxu0 0.0
        %563 = vmatpush1.msra.mxu0 0.0
        %564 = vmatprep.subr.mxu0 0.0
        %565 = vmatpush1.msra.mxu0 0.0
        %566 = vmatprep.subr.mxu0 0.0
        %567 = vmatpush1.msra.mxu0 0.0
        %568 = vmatprep.subr.mxu0 0.0
        %569 = vmatpush1.msra.mxu0 0.0
        %570 = vmatprep.subr.mxu0 0.0
        %571 = vmatpush1.msra.mxu0 0.0
        %572 = vmatprep.subr.mxu0 0.0
        %573 = vmatpush1.msra.mxu0 0.0
        %574 = vmatprep.subr.mxu0 0.0
        %575 = vmatpush1.msra.mxu0 0.0
        %576 = vmatprep.subr.mxu0 0.0
        %577 = vmatpush1.msra.mxu0 0.0
        %578 = vmatprep.subr.mxu0 0.0
        %579 = vmatpush1.msra.mxu0 0.0
        %580 = vmatprep.subr.mxu0 0.0
        %581 = vmatpush1.msra.mxu0 0.0
        %582 = vmatprep.subr.mxu0 0.0
        %583 = vmatpush1.msra.mxu0 0.0
        %584 = vmatprep.subr.mxu0 0.0
        %585 = vmatpush1.msra.mxu0 0.0
        %586 = vmatprep.subr.mxu0 0.0
        %587 = vmatpush1.msra.mxu0 0.0
        %588 = vmatprep.subr.mxu0 0.0
        %589 = vmatpush1.msra.mxu0 0.0
        %590 = vmatprep.subr.mxu0 0.0
        %591 = vmatpush1.msra.mxu0 0.0
        %592 = vmatprep.mubr.f32.mxu0 0.0
        %v593 = vand.u32 %v187, 4294901760
        %594 = vmatmul.mubr.f32.gmra.mrb[0].mxu0 %v593
        %v595 = vpop.f32.mrb[0].mxu0
        %v596 = vadd.f32 %v513, %v595
        %v597 = vpop.f32.mrb[0].mxu0
        %598 = vmatprep.mubr.f32.mxu0 0.0
        %v599 = vand.u32 %v190, 4294901760
        %600 = vmatmul.mubr.f32.gmra.mrb[0].mxu0 %v599
        %v601 = vpop.f32.mrb[0].mxu0
        %v602 = vadd.f32 %v521, %v601
        %v603 = vpop.f32.mrb[0].mxu0
        %604 = vdwg.mxu0
        %605 = vmatprep.subr.mxu0 0.0
        %606 = vmatpush1.msra.mxu0 %v180
        %607 = vmatprep.subr.mxu0 0.0
        %608 = vmatpush1.msra.mxu0 %v181
        %609 = vmatprep.subr.mxu0 0.0
        %610 = vmatpush1.msra.mxu0 0.0
        %611 = vmatprep.subr.mxu0 0.0
        %612 = vmatpush1.msra.mxu0 0.0
        %613 = vmatprep.subr.mxu0 0.0
        %614 = vmatpush1.msra.mxu0 0.0
        %615 = vmatprep.subr.mxu0 0.0
        %616 = vmatpush1.msra.mxu0 0.0
        %617 = vmatprep.subr.mxu0 0.0
        %618 = vmatpush1.msra.mxu0 0.0
        %619 = vmatprep.subr.mxu0 0.0
        %620 = vmatpush1.msra.mxu0 0.0
        %621 = vmatprep.subr.mxu0 0.0
        %622 = vmatpush1.msra.mxu0 0.0
        %623 = vmatprep.subr.mxu0 0.0
        %624 = vmatpush1.msra.mxu0 0.0
        %625 = vmatprep.subr.mxu0 0.0
        %626 = vmatpush1.msra.mxu0 0.0
        %627 = vmatprep.subr.mxu0 0.0
        %628 = vmatpush1.msra.mxu0 0.0
        %629 = vmatprep.subr.mxu0 0.0
        %630 = vmatpush1.msra.mxu0 0.0
        %631 = vmatprep.subr.mxu0 0.0
        %632 = vmatpush1.msra.mxu0 0.0
        %633 = vmatprep.subr.mxu0 0.0
        %634 = vmatpush1.msra.mxu0 0.0
        %635 = vmatprep.subr.mxu0 0.0
        %636 = vmatpush1.msra.mxu0 0.0
        %637 = vmatprep.subr.mxu0 0.0
        %638 = vmatpush1.msra.mxu0 0.0
        %639 = vmatprep.subr.mxu0 0.0
        %640 = vmatpush1.msra.mxu0 0.0
        %641 = vmatprep.subr.mxu0 0.0
        %642 = vmatpush1.msra.mxu0 0.0
        %643 = vmatprep.subr.mxu0 0.0
        %644 = vmatpush1.msra.mxu0 0.0
        %645 = vmatprep.subr.mxu0 0.0
        %646 = vmatpush1.msra.mxu0 0.0
        %647 = vmatprep.subr.mxu0 0.0
        %648 = vmatpush1.msra.mxu0 0.0
        %649 = vmatprep.subr.mxu0 0.0
        %650 = vmatpush1.msra.mxu0 0.0
        %651 = vmatprep.subr.mxu0 0.0
        %652 = vmatpush1.msra.mxu0 0.0
        %653 = vmatprep.subr.mxu0 0.0
        %654 = vmatpush1.msra.mxu0 0.0
        %655 = vmatprep.subr.mxu0 0.0
        %656 = vmatpush1.msra.mxu0 0.0
        %657 = vmatprep.subr.mxu0 0.0
        %658 = vmatpush1.msra.mxu0 0.0
        %659 = vmatprep.subr.mxu0 0.0
        %660 = vmatpush1.msra.mxu0 0.0
        %661 = vmatprep.subr.mxu0 0.0
        %662 = vmatpush1.msra.mxu0 0.0
        %663 = vmatprep.subr.mxu0 0.0
        %664 = vmatpush1.msra.mxu0 0.0
        %665 = vmatprep.subr.mxu0 0.0
        %666 = vmatpush1.msra.mxu0 0.0
        %667 = vmatprep.subr.mxu0 0.0
        %668 = vmatpush1.msra.mxu0 0.0
        %669 = vmatprep.mubr.f32.mxu0 0.0
        %v670 = vand.u32 %v187, 4294901760
        %671 = vmatmul.mubr.f32.gmra.mrb[0].mxu0 %v670
        %v672 = vpop.f32.mrb[0].mxu0
        %v673 = vadd.f32 %v596, %v672
        %v674 = vpop.f32.mrb[0].mxu0
        %675 = vmatprep.mubr.f32.mxu0 0.0
        %v676 = vand.u32 %v190, 4294901760
        %677 = vmatmul.mubr.f32.gmra.mrb[0].mxu0 %v676
        %v678 = vpop.f32.mrb[0].mxu0
        %v679 = vadd.f32 %v602, %v678
        %v680 = vpop.f32.mrb[0].mxu0
        %681 = vdwg.mxu0
        %vm682 = vcmask 31744
        %683 = vst.msk [vmem:[%s163] sm:$0xff] %vm682, %v673
        %684 = vst.msk [vmem:[%s163 + $0x8] sm:$0xff] %vm682, %v679
        %687 = vrot.lane.b32.xlu0 %v673, 124
        %v688 = vpop.permute.xlu0 %687
        %689 = vrot.lane.b32.xlu0 %v679, 124
        %v690 = vpop.permute.xlu0 %689
        %s693 = scalar_lea.vmem %s163, 16
        %694 = vst.msk [vmem:[%s693] sm:$0xff] %vm682, %v688
        %695 = vst.msk [vmem:[%s693 + $0x8] sm:$0xff] %vm682, %v690
        %696 = vrot.lane.b32.xlu0 %v673, 120
        %v697 = vpop.permute.xlu0 %696
        %698 = vrot.lane.b32.xlu0 %v679, 120
        %v699 = vpop.permute.xlu0 %698
        %s702 = scalar_lea.vmem %s163, 32
        %703 = vst.msk [vmem:[%s702] sm:$0xff] %vm682, %v697
        %704 = vst.msk [vmem:[%s702 + $0x8] sm:$0xff] %vm682, %v699
        %705 = vrot.lane.b32.xlu0 %v673, 116
        %v706 = vpop.permute.xlu0 %705
        %707 = vrot.lane.b32.xlu0 %v679, 116
        %v708 = vpop.permute.xlu0 %707
        %s711 = scalar_lea.vmem %s163, 48
        %712 = vst.msk [vmem:[%s711] sm:$0xff] %vm682, %v706
        %713 = vst.msk [vmem:[%s711 + $0x8] sm:$0xff] %vm682, %v708
        %s714 = scalar_lea.vmem %s131, 1 [#allocation2]
        %v715 = vld [vmem:[%s714] ss:$4 sm:$0xff]
        %s716 = scalar_lea.vmem %s131, 33 [#allocation2]
        %v717 = vld [vmem:[%s716] ss:$4 sm:$0xff]
        %v719 = vsel %vm185, %v715, 0
        %v722 = vsel %vm185, %v717, 0
        %724 = vmatprep.subr.mxu0 0.0
        %725 = vmatpush1.msra.mxu0 %v180
        %726 = vmatprep.subr.mxu0 0.0
        %727 = vmatpush1.msra.mxu0 %v181
        %728 = vmatprep.subr.mxu0 0.0
        %729 = vmatpush1.msra.mxu0 0.0
        %730 = vmatprep.subr.mxu0 0.0
        %731 = vmatpush1.msra.mxu0 0.0
        %732 = vmatprep.subr.mxu0 0.0
        %733 = vmatpush1.msra.mxu0 0.0
        %734 = vmatprep.subr.mxu0 0.0
        %735 = vmatpush1.msra.mxu0 0.0
        %736 = vmatprep.subr.mxu0 0.0
        %737 = vmatpush1.msra.mxu0 0.0
        %738 = vmatprep.subr.mxu0 0.0
        %739 = vmatpush1.msra.mxu0 0.0
        %740 = vmatprep.subr.mxu0 0.0
        %741 = vmatpush1.msra.mxu0 0.0
        %742 = vmatprep.subr.mxu0 0.0
        %743 = vmatpush1.msra.mxu0 0.0
        %744 = vmatprep.subr.mxu0 0.0
        %745 = vmatpush1.msra.mxu0 0.0
        %746 = vmatprep.subr.mxu0 0.0
        %747 = vmatpush1.msra.mxu0 0.0
        %748 = vmatprep.subr.mxu0 0.0
        %749 = vmatpush1.msra.mxu0 0.0
        %750 = vmatprep.subr.mxu0 0.0
        %751 = vmatpush1.msra.mxu0 0.0
        %752 = vmatprep.subr.mxu0 0.0
        %753 = vmatpush1.msra.mxu0 0.0
        %754 = vmatprep.subr.mxu0 0.0
        %755 = vmatpush1.msra.mxu0 0.0
        %756 = vmatprep.subr.mxu0 0.0
        %757 = vmatpush1.msra.mxu0 0.0
        %758 = vmatprep.subr.mxu0 0.0
        %759 = vmatpush1.msra.mxu0 0.0
        %760 = vmatprep.subr.mxu0 0.0
        %761 = vmatpush1.msra.mxu0 0.0
        %762 = vmatprep.subr.mxu0 0.0
        %763 = vmatpush1.msra.mxu0 0.0
        %764 = vmatprep.subr.mxu0 0.0
        %765 = vmatpush1.msra.mxu0 0.0
        %766 = vmatprep.subr.mxu0 0.0
        %767 = vmatpush1.msra.mxu0 0.0
        %768 = vmatprep.subr.mxu0 0.0
        %769 = vmatpush1.msra.mxu0 0.0
        %770 = vmatprep.subr.mxu0 0.0
        %771 = vmatpush1.msra.mxu0 0.0
        %772 = vmatprep.subr.mxu0 0.0
        %773 = vmatpush1.msra.mxu0 0.0
        %774 = vmatprep.subr.mxu0 0.0
        %775 = vmatpush1.msra.mxu0 0.0
        %776 = vmatprep.subr.mxu0 0.0
        %777 = vmatpush1.msra.mxu0 0.0
        %778 = vmatprep.subr.mxu0 0.0
        %779 = vmatpush1.msra.mxu0 0.0
        %780 = vmatprep.subr.mxu0 0.0
        %781 = vmatpush1.msra.mxu0 0.0
        %782 = vmatprep.subr.mxu0 0.0
        %783 = vmatpush1.msra.mxu0 0.0
        %784 = vmatprep.subr.mxu0 0.0
        %785 = vmatpush1.msra.mxu0 0.0
        %786 = vmatprep.subr.mxu0 0.0
        %787 = vmatpush1.msra.mxu0 0.0
        %788 = vmatprep.mubr.f32.mxu0 0.0
        %v789 = vand.u32 %v719, 4294901760
        %v790 = vsub.f32 %v719, %v789
        %v791 = vand.u32 %v790, 4294901760
        %v792 = vsub.f32 %v790, %v791
        %v793 = vand.u32 %v792, 4294901760
        %794 = vmatmul.mubr.f32.gmra.mrb[0].mxu0 %v793
        %v795 = vpop.f32.mrb[0].mxu0
        %v796 = vadd.f32 0.0, %v795
        %v797 = vpop.f32.mrb[0].mxu0
        %798 = vmatprep.mubr.f32.mxu0 0.0
        %v799 = vand.u32 %v722, 4294901760
        %v800 = vsub.f32 %v722, %v799
        %v801 = vand.u32 %v800, 4294901760
        %v802 = vsub.f32 %v800, %v801
        %v803 = vand.u32 %v802, 4294901760
        %804 = vmatmul.mubr.f32.gmra.mrb[0].mxu0 %v803
        %v805 = vpop.f32.mrb[0].mxu0
        %v806 = vadd.f32 0.0, %v805
        %v807 = vpop.f32.mrb[0].mxu0
        %808 = vdwg.mxu0
        %809 = vmatprep.subr.mxu0 0.0
        %v810 = vsub.f32 %v180, %v180
        %v811 = vand.u32 %v810, 4294901760
        %v812 = vsub.f32 %v810, %v811
        %v813 = vand.u32 %v812, 4294901760
        %814 = vmatpush1.msra.mxu0 %v813
        %815 = vmatprep.subr.mxu0 0.0
        %v816 = vsub.f32 %v181, %v181
        %v817 = vand.u32 %v816, 4294901760
        %v818 = vsub.f32 %v816, %v817
        %v819 = vand.u32 %v818, 4294901760
        %820 = vmatpush1.msra.mxu0 %v819
        %821 = vmatprep.subr.mxu0 0.0
        %822 = vmatpush1.msra.mxu0 0.0
        %823 = vmatprep.subr.mxu0 0.0
        %824 = vmatpush1.msra.mxu0 0.0
        %825 = vmatprep.subr.mxu0 0.0
        %826 = vmatpush1.msra.mxu0 0.0
        %827 = vmatprep.subr.mxu0 0.0
        %828 = vmatpush1.msra.mxu0 0.0
        %829 = vmatprep.subr.mxu0 0.0
        %830 = vmatpush1.msra.mxu0 0.0
        %831 = vmatprep.subr.mxu0 0.0
        %832 = vmatpush1.msra.mxu0 0.0
        %833 = vmatprep.subr.mxu0 0.0
        %834 = vmatpush1.msra.mxu0 0.0
        %835 = vmatprep.subr.mxu0 0.0
        %836 = vmatpush1.msra.mxu0 0.0
        %837 = vmatprep.subr.mxu0 0.0
        %838 = vmatpush1.msra.mxu0 0.0
        %839 = vmatprep.subr.mxu0 0.0
        %840 = vmatpush1.msra.mxu0 0.0
        %841 = vmatprep.subr.mxu0 0.0
        %842 = vmatpush1.msra.mxu0 0.0
        %843 = vmatprep.subr.mxu0 0.0
        %844 = vmatpush1.msra.mxu0 0.0
        %845 = vmatprep.subr.mxu0 0.0
        %846 = vmatpush1.msra.mxu0 0.0
        %847 = vmatprep.subr.mxu0 0.0
        %848 = vmatpush1.msra.mxu0 0.0
        %849 = vmatprep.subr.mxu0 0.0
        %850 = vmatpush1.msra.mxu0 0.0
        %851 = vmatprep.subr.mxu0 0.0
        %852 = vmatpush1.msra.mxu0 0.0
        %853 = vmatprep.subr.mxu0 0.0
        %854 = vmatpush1.msra.mxu0 0.0
        %855 = vmatprep.subr.mxu0 0.0
        %856 = vmatpush1.msra.mxu0 0.0
        %857 = vmatprep.subr.mxu0 0.0
        %858 = vmatpush1.msra.mxu0 0.0
        %859 = vmatprep.subr.mxu0 0.0
        %860 = vmatpush1.msra.mxu0 0.0
        %861 = vmatprep.subr.mxu0 0.0
        %862 = vmatpush1.msra.mxu0 0.0
        %863 = vmatprep.subr.mxu0 0.0
        %864 = vmatpush1.msra.mxu0 0.0
        %865 = vmatprep.subr.mxu0 0.0
        %866 = vmatpush1.msra.mxu0 0.0
        %867 = vmatprep.subr.mxu0 0.0
        %868 = vmatpush1.msra.mxu0 0.0
        %869 = vmatprep.subr.mxu0 0.0
        %870 = vmatpush1.msra.mxu0 0.0
        %871 = vmatprep.subr.mxu0 0.0
        %872 = vmatpush1.msra.mxu0 0.0
        %873 = vmatprep.subr.mxu0 0.0
        %874 = vmatpush1.msra.mxu0 0.0
        %875 = vmatprep.subr.mxu0 0.0
        %876 = vmatpush1.msra.mxu0 0.0
        %877 = vmatprep.subr.mxu0 0.0
        %878 = vmatpush1.msra.mxu0 0.0
        %879 = vmatprep.subr.mxu0 0.0
        %880 = vmatpush1.msra.mxu0 0.0
        %881 = vmatprep.mubr.f32.mxu0 0.0
        %v882 = vand.u32 %v719, 4294901760
        %883 = vmatmul.mubr.f32.gmra.mrb[0].mxu0 %v882
        %v884 = vpop.f32.mrb[0].mxu0
        %v885 = vadd.f32 %v796, %v884
        %v886 = vpop.f32.mrb[0].mxu0
        %887 = vmatprep.mubr.f32.mxu0 0.0
        %v888 = vand.u32 %v722, 4294901760
        %889 = vmatmul.mubr.f32.gmra.mrb[0].mxu0 %v888
        %v890 = vpop.f32.mrb[0].mxu0
        %v891 = vadd.f32 %v806, %v890
        %v892 = vpop.f32.mrb[0].mxu0
        %893 = vdwg.mxu0
        %894 = vmatprep.subr.mxu0 0.0
        %v895 = vsub.f32 %v180, %v180
        %896 = vmatpush1.msra.mxu0 %v895
        %897 = vmatprep.subr.mxu0 0.0
        %v898 = vsub.f32 %v181, %v181
        %899 = vmatpush1.msra.mxu0 %v898
        %900 = vmatprep.subr.mxu0 0.0
        %901 = vmatpush1.msra.mxu0 0.0
        %902 = vmatprep.subr.mxu0 0.0
        %903 = vmatpush1.msra.mxu0 0.0
        %904 = vmatprep.subr.mxu0 0.0
        %905 = vmatpush1.msra.mxu0 0.0
        %906 = vmatprep.subr.mxu0 0.0
        %907 = vmatpush1.msra.mxu0 0.0
        %908 = vmatprep.subr.mxu0 0.0
        %909 = vmatpush1.msra.mxu0 0.0
        %910 = vmatprep.subr.mxu0 0.0
        %911 = vmatpush1.msra.mxu0 0.0
        %912 = vmatprep.subr.mxu0 0.0
        %913 = vmatpush1.msra.mxu0 0.0
        %914 = vmatprep.subr.mxu0 0.0
        %915 = vmatpush1.msra.mxu0 0.0
        %916 = vmatprep.subr.mxu0 0.0
        %917 = vmatpush1.msra.mxu0 0.0
        %918 = vmatprep.subr.mxu0 0.0
        %919 = vmatpush1.msra.mxu0 0.0
        %920 = vmatprep.subr.mxu0 0.0
        %921 = vmatpush1.msra.mxu0 0.0
        %922 = vmatprep.subr.mxu0 0.0
        %923 = vmatpush1.msra.mxu0 0.0
        %924 = vmatprep.subr.mxu0 0.0
        %925 = vmatpush1.msra.mxu0 0.0
        %926 = vmatprep.subr.mxu0 0.0
        %927 = vmatpush1.msra.mxu0 0.0
        %928 = vmatprep.subr.mxu0 0.0
        %929 = vmatpush1.msra.mxu0 0.0
        %930 = vmatprep.subr.mxu0 0.0
        %931 = vmatpush1.msra.mxu0 0.0
        %932 = vmatprep.subr.mxu0 0.0
        %933 = vmatpush1.msra.mxu0 0.0
        %934 = vmatprep.subr.mxu0 0.0
        %935 = vmatpush1.msra.mxu0 0.0
        %936 = vmatprep.subr.mxu0 0.0
        %937 = vmatpush1.msra.mxu0 0.0
        %938 = vmatprep.subr.mxu0 0.0
        %939 = vmatpush1.msra.mxu0 0.0
        %940 = vmatprep.subr.mxu0 0.0
        %941 = vmatpush1.msra.mxu0 0.0
        %942 = vmatprep.subr.mxu0 0.0
        %943 = vmatpush1.msra.mxu0 0.0
        %944 = vmatprep.subr.mxu0 0.0
        %945 = vmatpush1.msra.mxu0 0.0
        %946 = vmatprep.subr.mxu0 0.0
        %947 = vmatpush1.msra.mxu0 0.0
        %948 = vmatprep.subr.mxu0 0.0
        %949 = vmatpush1.msra.mxu0 0.0
        %950 = vmatprep.subr.mxu0 0.0
        %951 = vmatpush1.msra.mxu0 0.0
        %952 = vmatprep.subr.mxu0 0.0
        %953 = vmatpush1.msra.mxu0 0.0
        %954 = vmatprep.subr.mxu0 0.0
        %955 = vmatpush1.msra.mxu0 0.0
        %956 = vmatprep.subr.mxu0 0.0
        %957 = vmatpush1.msra.mxu0 0.0
        %958 = vmatprep.subr.mxu0 0.0
        %959 = vmatpush1.msra.mxu0 0.0
        %960 = vmatprep.mubr.f32.mxu0 0.0
        %v961 = vand.u32 %v719, 4294901760
        %v962 = vsub.f32 %v719, %v961
        %963 = vmatmul.mubr.f32.gmra.mrb[0].mxu0 %v962
        %v964 = vpop.f32.mrb[0].mxu0
        %v965 = vadd.f32 %v885, %v964
        %v966 = vpop.f32.mrb[0].mxu0
        %967 = vmatprep.mubr.f32.mxu0 0.0
        %v968 = vand.u32 %v722, 4294901760
        %v969 = vsub.f32 %v722, %v968
        %970 = vmatmul.mubr.f32.gmra.mrb[0].mxu0 %v969
        %v971 = vpop.f32.mrb[0].mxu0
        %v972 = vadd.f32 %v891, %v971
        %v973 = vpop.f32.mrb[0].mxu0
        %974 = vdwg.mxu0
        %975 = vmatprep.subr.mxu0 0.0
        %976 = vmatpush1.msra.mxu0 %v180
        %977 = vmatprep.subr.mxu0 0.0
        %978 = vmatpush1.msra.mxu0 %v181
        %979 = vmatprep.subr.mxu0 0.0
        %980 = vmatpush1.msra.mxu0 0.0
        %981 = vmatprep.subr.mxu0 0.0
        %982 = vmatpush1.msra.mxu0 0.0
        %983 = vmatprep.subr.mxu0 0.0
        %984 = vmatpush1.msra.mxu0 0.0
        %985 = vmatprep.subr.mxu0 0.0
        %986 = vmatpush1.msra.mxu0 0.0
        %987 = vmatprep.subr.mxu0 0.0
        %988 = vmatpush1.msra.mxu0 0.0
        %989 = vmatprep.subr.mxu0 0.0
        %990 = vmatpush1.msra.mxu0 0.0
        %991 = vmatprep.subr.mxu0 0.0
        %992 = vmatpush1.msra.mxu0 0.0
        %993 = vmatprep.subr.mxu0 0.0
        %994 = vmatpush1.msra.mxu0 0.0
        %995 = vmatprep.subr.mxu0 0.0
        %996 = vmatpush1.msra.mxu0 0.0
        %997 = vmatprep.subr.mxu0 0.0
        %998 = vmatpush1.msra.mxu0 0.0
        %999 = vmatprep.subr.mxu0 0.0
        %1000 = vmatpush1.msra.mxu0 0.0
        %1001 = vmatprep.subr.mxu0 0.0
        %1002 = vmatpush1.msra.mxu0 0.0
        %1003 = vmatprep.subr.mxu0 0.0
        %1004 = vmatpush1.msra.mxu0 0.0
        %1005 = vmatprep.subr.mxu0 0.0
        %1006 = vmatpush1.msra.mxu0 0.0
        %1007 = vmatprep.subr.mxu0 0.0
        %1008 = vmatpush1.msra.mxu0 0.0
        %1009 = vmatprep.subr.mxu0 0.0
        %1010 = vmatpush1.msra.mxu0 0.0
        %1011 = vmatprep.subr.mxu0 0.0
        %1012 = vmatpush1.msra.mxu0 0.0
        %1013 = vmatprep.subr.mxu0 0.0
        %1014 = vmatpush1.msra.mxu0 0.0
        %1015 = vmatprep.subr.mxu0 0.0
        %1016 = vmatpush1.msra.mxu0 0.0
        %1017 = vmatprep.subr.mxu0 0.0
        %1018 = vmatpush1.msra.mxu0 0.0
        %1019 = vmatprep.subr.mxu0 0.0
        %1020 = vmatpush1.msra.mxu0 0.0
        %1021 = vmatprep.subr.mxu0 0.0
        %1022 = vmatpush1.msra.mxu0 0.0
        %1023 = vmatprep.subr.mxu0 0.0
        %1024 = vmatpush1.msra.mxu0 0.0
        %1025 = vmatprep.subr.mxu0 0.0
        %1026 = vmatpush1.msra.mxu0 0.0
        %1027 = vmatprep.subr.mxu0 0.0
        %1028 = vmatpush1.msra.mxu0 0.0
        %1029 = vmatprep.subr.mxu0 0.0
        %1030 = vmatpush1.msra.mxu0 0.0
        %1031 = vmatprep.subr.mxu0 0.0
        %1032 = vmatpush1.msra.mxu0 0.0
        %1033 = vmatprep.subr.mxu0 0.0
        %1034 = vmatpush1.msra.mxu0 0.0
        %1035 = vmatprep.subr.mxu0 0.0
        %1036 = vmatpush1.msra.mxu0 0.0
        %1037 = vmatprep.subr.mxu0 0.0
        %1038 = vmatpush1.msra.mxu0 0.0
        %1039 = vmatprep.mubr.f32.mxu0 0.0
        %v1040 = vand.u32 %v719, 4294901760
        %v1041 = vsub.f32 %v719, %v1040
        %v1042 = vand.u32 %v1041, 4294901760
        %1043 = vmatmul.mubr.f32.gmra.mrb[0].mxu0 %v1042
        %v1044 = vpop.f32.mrb[0].mxu0
        %v1045 = vadd.f32 %v965, %v1044
        %v1046 = vpop.f32.mrb[0].mxu0
        %1047 = vmatprep.mubr.f32.mxu0 0.0
        %v1048 = vand.u32 %v722, 4294901760
        %v1049 = vsub.f32 %v722, %v1048
        %v1050 = vand.u32 %v1049, 4294901760
        %1051 = vmatmul.mubr.f32.gmra.mrb[0].mxu0 %v1050
        %v1052 = vpop.f32.mrb[0].mxu0
        %v1053 = vadd.f32 %v972, %v1052
        %v1054 = vpop.f32.mrb[0].mxu0
        %1055 = vdwg.mxu0
        %1056 = vmatprep.subr.mxu0 0.0
        %v1057 = vsub.f32 %v180, %v180
        %v1058 = vand.u32 %v1057, 4294901760
        %1059 = vmatpush1.msra.mxu0 %v1058
        %1060 = vmatprep.subr.mxu0 0.0
        %v1061 = vsub.f32 %v181, %v181
        %v1062 = vand.u32 %v1061, 4294901760
        %1063 = vmatpush1.msra.mxu0 %v1062
        %1064 = vmatprep.subr.mxu0 0.0
        %1065 = vmatpush1.msra.mxu0 0.0
        %1066 = vmatprep.subr.mxu0 0.0
        %1067 = vmatpush1.msra.mxu0 0.0
        %1068 = vmatprep.subr.mxu0 0.0
        %1069 = vmatpush1.msra.mxu0 0.0
        %1070 = vmatprep.subr.mxu0 0.0
        %1071 = vmatpush1.msra.mxu0 0.0
        %1072 = vmatprep.subr.mxu0 0.0
        %1073 = vmatpush1.msra.mxu0 0.0
        %1074 = vmatprep.subr.mxu0 0.0
        %1075 = vmatpush1.msra.mxu0 0.0
        %1076 = vmatprep.subr.mxu0 0.0
        %1077 = vmatpush1.msra.mxu0 0.0
        %1078 = vmatprep.subr.mxu0 0.0
        %1079 = vmatpush1.msra.mxu0 0.0
        %1080 = vmatprep.subr.mxu0 0.0
        %1081 = vmatpush1.msra.mxu0 0.0
        %1082 = vmatprep.subr.mxu0 0.0
        %1083 = vmatpush1.msra.mxu0 0.0
        %1084 = vmatprep.subr.mxu0 0.0
        %1085 = vmatpush1.msra.mxu0 0.0
        %1086 = vmatprep.subr.mxu0 0.0
        %1087 = vmatpush1.msra.mxu0 0.0
        %1088 = vmatprep.subr.mxu0 0.0
        %1089 = vmatpush1.msra.mxu0 0.0
        %1090 = vmatprep.subr.mxu0 0.0
        %1091 = vmatpush1.msra.mxu0 0.0
        %1092 = vmatprep.subr.mxu0 0.0
        %1093 = vmatpush1.msra.mxu0 0.0
        %1094 = vmatprep.subr.mxu0 0.0
        %1095 = vmatpush1.msra.mxu0 0.0
        %1096 = vmatprep.subr.mxu0 0.0
        %1097 = vmatpush1.msra.mxu0 0.0
        %1098 = vmatprep.subr.mxu0 0.0
        %1099 = vmatpush1.msra.mxu0 0.0
        %1100 = vmatprep.subr.mxu0 0.0
        %1101 = vmatpush1.msra.mxu0 0.0
        %1102 = vmatprep.subr.mxu0 0.0
        %1103 = vmatpush1.msra.mxu0 0.0
        %1104 = vmatprep.subr.mxu0 0.0
        %1105 = vmatpush1.msra.mxu0 0.0
        %1106 = vmatprep.subr.mxu0 0.0
        %1107 = vmatpush1.msra.mxu0 0.0
        %1108 = vmatprep.subr.mxu0 0.0
        %1109 = vmatpush1.msra.mxu0 0.0
        %1110 = vmatprep.subr.mxu0 0.0
        %1111 = vmatpush1.msra.mxu0 0.0
        %1112 = vmatprep.subr.mxu0 0.0
        %1113 = vmatpush1.msra.mxu0 0.0
        %1114 = vmatprep.subr.mxu0 0.0
        %1115 = vmatpush1.msra.mxu0 0.0
        %1116 = vmatprep.subr.mxu0 0.0
        %1117 = vmatpush1.msra.mxu0 0.0
        %1118 = vmatprep.subr.mxu0 0.0
        %1119 = vmatpush1.msra.mxu0 0.0
        %1120 = vmatprep.subr.mxu0 0.0
        %1121 = vmatpush1.msra.mxu0 0.0
        %1122 = vmatprep.subr.mxu0 0.0
        %1123 = vmatpush1.msra.mxu0 0.0
        %1124 = vmatprep.mubr.f32.mxu0 0.0
        %v1125 = vand.u32 %v719, 4294901760
        %1126 = vmatmul.mubr.f32.gmra.mrb[0].mxu0 %v1125
        %v1127 = vpop.f32.mrb[0].mxu0
        %v1128 = vadd.f32 %v1045, %v1127
        %v1129 = vpop.f32.mrb[0].mxu0
        %1130 = vmatprep.mubr.f32.mxu0 0.0
        %v1131 = vand.u32 %v722, 4294901760
        %1132 = vmatmul.mubr.f32.gmra.mrb[0].mxu0 %v1131
        %v1133 = vpop.f32.mrb[0].mxu0
        %v1134 = vadd.f32 %v1053, %v1133
        %v1135 = vpop.f32.mrb[0].mxu0
        %1136 = vdwg.mxu0
        %1137 = vmatprep.subr.mxu0 0.0
        %1138 = vmatpush1.msra.mxu0 %v180
        %1139 = vmatprep.subr.mxu0 0.0
        %1140 = vmatpush1.msra.mxu0 %v181
        %1141 = vmatprep.subr.mxu0 0.0
        %1142 = vmatpush1.msra.mxu0 0.0
        %1143 = vmatprep.subr.mxu0 0.0
        %1144 = vmatpush1.msra.mxu0 0.0
        %1145 = vmatprep.subr.mxu0 0.0
        %1146 = vmatpush1.msra.mxu0 0.0
        %1147 = vmatprep.subr.mxu0 0.0
        %1148 = vmatpush1.msra.mxu0 0.0
        %1149 = vmatprep.subr.mxu0 0.0
        %1150 = vmatpush1.msra.mxu0 0.0
        %1151 = vmatprep.subr.mxu0 0.0
        %1152 = vmatpush1.msra.mxu0 0.0
        %1153 = vmatprep.subr.mxu0 0.0
        %1154 = vmatpush1.msra.mxu0 0.0
        %1155 = vmatprep.subr.mxu0 0.0
        %1156 = vmatpush1.msra.mxu0 0.0
        %1157 = vmatprep.subr.mxu0 0.0
        %1158 = vmatpush1.msra.mxu0 0.0
        %1159 = vmatprep.subr.mxu0 0.0
        %1160 = vmatpush1.msra.mxu0 0.0
        %1161 = vmatprep.subr.mxu0 0.0
        %1162 = vmatpush1.msra.mxu0 0.0
        %1163 = vmatprep.subr.mxu0 0.0
        %1164 = vmatpush1.msra.mxu0 0.0
        %1165 = vmatprep.subr.mxu0 0.0
        %1166 = vmatpush1.msra.mxu0 0.0
        %1167 = vmatprep.subr.mxu0 0.0
        %1168 = vmatpush1.msra.mxu0 0.0
        %1169 = vmatprep.subr.mxu0 0.0
        %1170 = vmatpush1.msra.mxu0 0.0
        %1171 = vmatprep.subr.mxu0 0.0
        %1172 = vmatpush1.msra.mxu0 0.0
        %1173 = vmatprep.subr.mxu0 0.0
        %1174 = vmatpush1.msra.mxu0 0.0
        %1175 = vmatprep.subr.mxu0 0.0
        %1176 = vmatpush1.msra.mxu0 0.0
        %1177 = vmatprep.subr.mxu0 0.0
        %1178 = vmatpush1.msra.mxu0 0.0
        %1179 = vmatprep.subr.mxu0 0.0
        %1180 = vmatpush1.msra.mxu0 0.0
        %1181 = vmatprep.subr.mxu0 0.0
        %1182 = vmatpush1.msra.mxu0 0.0
        %1183 = vmatprep.subr.mxu0 0.0
        %1184 = vmatpush1.msra.mxu0 0.0
        %1185 = vmatprep.subr.mxu0 0.0
        %1186 = vmatpush1.msra.mxu0 0.0
        %1187 = vmatprep.subr.mxu0 0.0
        %1188 = vmatpush1.msra.mxu0 0.0
        %1189 = vmatprep.subr.mxu0 0.0
        %1190 = vmatpush1.msra.mxu0 0.0
        %1191 = vmatprep.subr.mxu0 0.0
        %1192 = vmatpush1.msra.mxu0 0.0
        %1193 = vmatprep.subr.mxu0 0.0
        %1194 = vmatpush1.msra.mxu0 0.0
        %1195 = vmatprep.subr.mxu0 0.0
        %1196 = vmatpush1.msra.mxu0 0.0
        %1197 = vmatprep.subr.mxu0 0.0
        %1198 = vmatpush1.msra.mxu0 0.0
        %1199 = vmatprep.subr.mxu0 0.0
        %1200 = vmatpush1.msra.mxu0 0.0
        %1201 = vmatprep.mubr.f32.mxu0 0.0
        %v1202 = vand.u32 %v719, 4294901760
        %1203 = vmatmul.mubr.f32.gmra.mrb[0].mxu0 %v1202
        %v1204 = vpop.f32.mrb[0].mxu0
        %v1205 = vadd.f32 %v1128, %v1204
        %v1206 = vpop.f32.mrb[0].mxu0
        %1207 = vmatprep.mubr.f32.mxu0 0.0
        %v1208 = vand.u32 %v722, 4294901760
        %1209 = vmatmul.mubr.f32.gmra.mrb[0].mxu0 %v1208
        %v1210 = vpop.f32.mrb[0].mxu0
        %v1211 = vadd.f32 %v1134, %v1210
        %v1212 = vpop.f32.mrb[0].mxu0
        %1213 = vdwg.mxu0
        %s1214 = scalar_lea.vmem %s163, 64
        %1215 = vst.msk [vmem:[%s1214] sm:$0xff] %vm682, %v1205
        %1216 = vst.msk [vmem:[%s1214 + $0x8] sm:$0xff] %vm682, %v1211
        %1219 = vrot.lane.b32.xlu0 %v1205, 124
        %v1220 = vpop.permute.xlu0 %1219
        %1221 = vrot.lane.b32.xlu0 %v1211, 124
        %v1222 = vpop.permute.xlu0 %1221
        %s1225 = scalar_lea.vmem %s163, 80
        %1226 = vst.msk [vmem:[%s1225] sm:$0xff] %vm682, %v1220
        %1227 = vst.msk [vmem:[%s1225 + $0x8] sm:$0xff] %vm682, %v1222
        %1228 = vrot.lane.b32.xlu0 %v1205, 120
        %v1229 = vpop.permute.xlu0 %1228
        %1230 = vrot.lane.b32.xlu0 %v1211, 120
        %v1231 = vpop.permute.xlu0 %1230
        %s1234 = scalar_lea.vmem %s163, 96
        %1235 = vst.msk [vmem:[%s1234] sm:$0xff] %vm682, %v1229
        %1236 = vst.msk [vmem:[%s1234 + $0x8] sm:$0xff] %vm682, %v1231
        %1237 = vrot.lane.b32.xlu0 %v1205, 116
        %v1238 = vpop.permute.xlu0 %1237
        %1239 = vrot.lane.b32.xlu0 %v1211, 116
        %v1240 = vpop.permute.xlu0 %1239
        %s1243 = scalar_lea.vmem %s163, 112
        %1244 = vst.msk [vmem:[%s1243] sm:$0xff] %vm682, %v1238
        %1245 = vst.msk [vmem:[%s1243 + $0x8] sm:$0xff] %vm682, %v1240
        %s1246 = scalar_lea.vmem %s131, 2 [#allocation2]
        %v1247 = vld [vmem:[%s1246] ss:$4 sm:$0xff]
        %s1248 = scalar_lea.vmem %s131, 34 [#allocation2]
        %v1249 = vld [vmem:[%s1248] ss:$4 sm:$0xff]
        %v1251 = vsel %vm185, %v1247, 0
        %v1254 = vsel %vm185, %v1249, 0
        %1256 = vmatprep.subr.mxu0 0.0
        %1257 = vmatpush1.msra.mxu0 %v180
        %1258 = vmatprep.subr.mxu0 0.0
        %1259 = vmatpush1.msra.mxu0 %v181
        %1260 = vmatprep.subr.mxu0 0.0
        %1261 = vmatpush1.msra.mxu0 0.0
        %1262 = vmatprep.subr.mxu0 0.0
        %1263 = vmatpush1.msra.mxu0 0.0
        %1264 = vmatprep.subr.mxu0 0.0
        %1265 = vmatpush1.msra.mxu0 0.0
        %1266 = vmatprep.subr.mxu0 0.0
        %1267 = vmatpush1.msra.mxu0 0.0
        %1268 = vmatprep.subr.mxu0 0.0
        %1269 = vmatpush1.msra.mxu0 0.0
        %1270 = vmatprep.subr.mxu0 0.0
        %1271 = vmatpush1.msra.mxu0 0.0
        %1272 = vmatprep.subr.mxu0 0.0
        %1273 = vmatpush1.msra.mxu0 0.0
        %1274 = vmatprep.subr.mxu0 0.0
        %1275 = vmatpush1.msra.mxu0 0.0
        %1276 = vmatprep.subr.mxu0 0.0
        %1277 = vmatpush1.msra.mxu0 0.0
        %1278 = vmatprep.subr.mxu0 0.0
        %1279 = vmatpush1.msra.mxu0 0.0
        %1280 = vmatprep.subr.mxu0 0.0
        %1281 = vmatpush1.msra.mxu0 0.0
        %1282 = vmatprep.subr.mxu0 0.0
        %1283 = vmatpush1.msra.mxu0 0.0
        %1284 = vmatprep.subr.mxu0 0.0
        %1285 = vmatpush1.msra.mxu0 0.0
        %1286 = vmatprep.subr.mxu0 0.0
        %1287 = vmatpush1.msra.mxu0 0.0
        %1288 = vmatprep.subr.mxu0 0.0
        %1289 = vmatpush1.msra.mxu0 0.0
        %1290 = vmatprep.subr.mxu0 0.0
        %1291 = vmatpush1.msra.mxu0 0.0
        %1292 = vmatprep.subr.mxu0 0.0
        %1293 = vmatpush1.msra.mxu0 0.0
        %1294 = vmatprep.subr.mxu0 0.0
        %1295 = vmatpush1.msra.mxu0 0.0
        %1296 = vmatprep.subr.mxu0 0.0
        %1297 = vmatpush1.msra.mxu0 0.0
        %1298 = vmatprep.subr.mxu0 0.0
        %1299 = vmatpush1.msra.mxu0 0.0
        %1300 = vmatprep.subr.mxu0 0.0
        %1301 = vmatpush1.msra.mxu0 0.0
        %1302 = vmatprep.subr.mxu0 0.0
        %1303 = vmatpush1.msra.mxu0 0.0
        %1304 = vmatprep.subr.mxu0 0.0
        %1305 = vmatpush1.msra.mxu0 0.0
        %1306 = vmatprep.subr.mxu0 0.0
        %1307 = vmatpush1.msra.mxu0 0.0
        %1308 = vmatprep.subr.mxu0 0.0
        %1309 = vmatpush1.msra.mxu0 0.0
        %1310 = vmatprep.subr.mxu0 0.0
        %1311 = vmatpush1.msra.mxu0 0.0
        %1312 = vmatprep.subr.mxu0 0.0
        %1313 = vmatpush1.msra.mxu0 0.0
        %1314 = vmatprep.subr.mxu0 0.0
        %1315 = vmatpush1.msra.mxu0 0.0
        %1316 = vmatprep.subr.mxu0 0.0
        %1317 = vmatpush1.msra.mxu0 0.0
        %1318 = vmatprep.subr.mxu0 0.0
        %1319 = vmatpush1.msra.mxu0 0.0
        %1320 = vmatprep.mubr.f32.mxu0 0.0
        %v1321 = vand.u32 %v1251, 4294901760
        %v1322 = vsub.f32 %v1251, %v1321
        %v1323 = vand.u32 %v1322, 4294901760
        %v1324 = vsub.f32 %v1322, %v1323
        %v1325 = vand.u32 %v1324, 4294901760
        %1326 = vmatmul.mubr.f32.gmra.mrb[0].mxu0 %v1325
        %v1327 = vpop.f32.mrb[0].mxu0
        %v1328 = vadd.f32 0.0, %v1327
        %v1329 = vpop.f32.mrb[0].mxu0
        %1330 = vmatprep.mubr.f32.mxu0 0.0
        %v1331 = vand.u32 %v1254, 4294901760
        %v1332 = vsub.f32 %v1254, %v1331
        %v1333 = vand.u32 %v1332, 4294901760
        %v1334 = vsub.f32 %v1332, %v1333
        %v1335 = vand.u32 %v1334, 4294901760
        %1336 = vmatmul.mubr.f32.gmra.mrb[0].mxu0 %v1335
        %v1337 = vpop.f32.mrb[0].mxu0
        %v1338 = vadd.f32 0.0, %v1337
        %v1339 = vpop.f32.mrb[0].mxu0
        %1340 = vdwg.mxu0
        %1341 = vmatprep.subr.mxu0 0.0
        %v1342 = vsub.f32 %v180, %v180
        %v1343 = vand.u32 %v1342, 4294901760
        %v1344 = vsub.f32 %v1342, %v1343
        %v1345 = vand.u32 %v1344, 4294901760
        %1346 = vmatpush1.msra.mxu0 %v1345
        %1347 = vmatprep.subr.mxu0 0.0
        %v1348 = vsub.f32 %v181, %v181
        %v1349 = vand.u32 %v1348, 4294901760
        %v1350 = vsub.f32 %v1348, %v1349
        %v1351 = vand.u32 %v1350, 4294901760
        %1352 = vmatpush1.msra.mxu0 %v1351
        %1353 = vmatprep.subr.mxu0 0.0
        %1354 = vmatpush1.msra.mxu0 0.0
        %1355 = vmatprep.subr.mxu0 0.0
        %1356 = vmatpush1.msra.mxu0 0.0
        %1357 = vmatprep.subr.mxu0 0.0
        %1358 = vmatpush1.msra.mxu0 0.0
        %1359 = vmatprep.subr.mxu0 0.0
        %1360 = vmatpush1.msra.mxu0 0.0
        %1361 = vmatprep.subr.mxu0 0.0
        %1362 = vmatpush1.msra.mxu0 0.0
        %1363 = vmatprep.subr.mxu0 0.0
        %1364 = vmatpush1.msra.mxu0 0.0
        %1365 = vmatprep.subr.mxu0 0.0
        %1366 = vmatpush1.msra.mxu0 0.0
        %1367 = vmatprep.subr.mxu0 0.0
        %1368 = vmatpush1.msra.mxu0 0.0
        %1369 = vmatprep.subr.mxu0 0.0
        %1370 = vmatpush1.msra.mxu0 0.0
        %1371 = vmatprep.subr.mxu0 0.0
        %1372 = vmatpush1.msra.mxu0 0.0
        %1373 = vmatprep.subr.mxu0 0.0
        %1374 = vmatpush1.msra.mxu0 0.0
        %1375 = vmatprep.subr.mxu0 0.0
        %1376 = vmatpush1.msra.mxu0 0.0
        %1377 = vmatprep.subr.mxu0 0.0
        %1378 = vmatpush1.msra.mxu0 0.0
        %1379 = vmatprep.subr.mxu0 0.0
        %1380 = vmatpush1.msra.mxu0 0.0
        %1381 = vmatprep.subr.mxu0 0.0
        %1382 = vmatpush1.msra.mxu0 0.0
        %1383 = vmatprep.subr.mxu0 0.0
        %1384 = vmatpush1.msra.mxu0 0.0
        %1385 = vmatprep.subr.mxu0 0.0
        %1386 = vmatpush1.msra.mxu0 0.0
        %1387 = vmatprep.subr.mxu0 0.0
        %1388 = vmatpush1.msra.mxu0 0.0
        %1389 = vmatprep.subr.mxu0 0.0
        %1390 = vmatpush1.msra.mxu0 0.0
        %1391 = vmatprep.subr.mxu0 0.0
        %1392 = vmatpush1.msra.mxu0 0.0
        %1393 = vmatprep.subr.mxu0 0.0
        %1394 = vmatpush1.msra.mxu0 0.0
        %1395 = vmatprep.subr.mxu0 0.0
        %1396 = vmatpush1.msra.mxu0 0.0
        %1397 = vmatprep.subr.mxu0 0.0
        %1398 = vmatpush1.msra.mxu0 0.0
        %1399 = vmatprep.subr.mxu0 0.0
        %1400 = vmatpush1.msra.mxu0 0.0
        %1401 = vmatprep.subr.mxu0 0.0
        %1402 = vmatpush1.msra.mxu0 0.0
        %1403 = vmatprep.subr.mxu0 0.0
        %1404 = vmatpush1.msra.mxu0 0.0
        %1405 = vmatprep.subr.mxu0 0.0
        %1406 = vmatpush1.msra.mxu0 0.0
        %1407 = vmatprep.subr.mxu0 0.0
        %1408 = vmatpush1.msra.mxu0 0.0
        %1409 = vmatprep.subr.mxu0 0.0
        %1410 = vmatpush1.msra.mxu0 0.0
        %1411 = vmatprep.subr.mxu0 0.0
        %1412 = vmatpush1.msra.mxu0 0.0
        %1413 = vmatprep.mubr.f32.mxu0 0.0
        %v1414 = vand.u32 %v1251, 4294901760
        %1415 = vmatmul.mubr.f32.gmra.mrb[0].mxu0 %v1414
        %v1416 = vpop.f32.mrb[0].mxu0
        %v1417 = vadd.f32 %v1328, %v1416
        %v1418 = vpop.f32.mrb[0].mxu0
        %1419 = vmatprep.mubr.f32.mxu0 0.0
        %v1420 = vand.u32 %v1254, 4294901760
        %1421 = vmatmul.mubr.f32.gmra.mrb[0].mxu0 %v1420
        %v1422 = vpop.f32.mrb[0].mxu0
        %v1423 = vadd.f32 %v1338, %v1422
        %v1424 = vpop.f32.mrb[0].mxu0
        %1425 = vdwg.mxu0
        %1426 = vmatprep.subr.mxu0 0.0
        %v1427 = vsub.f32 %v180, %v180
        %1428 = vmatpush1.msra.mxu0 %v1427
        %1429 = vmatprep.subr.mxu0 0.0
        %v1430 = vsub.f32 %v181, %v181
        %1431 = vmatpush1.msra.mxu0 %v1430
        %1432 = vmatprep.subr.mxu0 0.0
        %1433 = vmatpush1.msra.mxu0 0.0
        %1434 = vmatprep.subr.mxu0 0.0
        %1435 = vmatpush1.msra.mxu0 0.0
        %1436 = vmatprep.subr.mxu0 0.0
        %1437 = vmatpush1.msra.mxu0 0.0
        %1438 = vmatprep.subr.mxu0 0.0
        %1439 = vmatpush1.msra.mxu0 0.0
        %1440 = vmatprep.subr.mxu0 0.0
        %1441 = vmatpush1.msra.mxu0 0.0
        %1442 = vmatprep.subr.mxu0 0.0
        %1443 = vmatpush1.msra.mxu0 0.0
        %1444 = vmatprep.subr.mxu0 0.0
        %1445 = vmatpush1.msra.mxu0 0.0
        %1446 = vmatprep.subr.mxu0 0.0
        %1447 = vmatpush1.msra.mxu0 0.0
        %1448 = vmatprep.subr.mxu0 0.0
        %1449 = vmatpush1.msra.mxu0 0.0
        %1450 = vmatprep.subr.mxu0 0.0
        %1451 = vmatpush1.msra.mxu0 0.0
        %1452 = vmatprep.subr.mxu0 0.0
        %1453 = vmatpush1.msra.mxu0 0.0
        %1454 = vmatprep.subr.mxu0 0.0
        %1455 = vmatpush1.msra.mxu0 0.0
        %1456 = vmatprep.subr.mxu0 0.0
        %1457 = vmatpush1.msra.mxu0 0.0
        %1458 = vmatprep.subr.mxu0 0.0
        %1459 = vmatpush1.msra.mxu0 0.0
        %1460 = vmatprep.subr.mxu0 0.0
        %1461 = vmatpush1.msra.mxu0 0.0
        %1462 = vmatprep.subr.mxu0 0.0
        %1463 = vmatpush1.msra.mxu0 0.0
        %1464 = vmatprep.subr.mxu0 0.0
        %1465 = vmatpush1.msra.mxu0 0.0
        %1466 = vmatprep.subr.mxu0 0.0
        %1467 = vmatpush1.msra.mxu0 0.0
        %1468 = vmatprep.subr.mxu0 0.0
        %1469 = vmatpush1.msra.mxu0 0.0
        %1470 = vmatprep.subr.mxu0 0.0
        %1471 = vmatpush1.msra.mxu0 0.0
        %1472 = vmatprep.subr.mxu0 0.0
        %1473 = vmatpush1.msra.mxu0 0.0
        %1474 = vmatprep.subr.mxu0 0.0
        %1475 = vmatpush1.msra.mxu0 0.0
        %1476 = vmatprep.subr.mxu0 0.0
        %1477 = vmatpush1.msra.mxu0 0.0
        %1478 = vmatprep.subr.mxu0 0.0
        %1479 = vmatpush1.msra.mxu0 0.0
        %1480 = vmatprep.subr.mxu0 0.0
        %1481 = vmatpush1.msra.mxu0 0.0
        %1482 = vmatprep.subr.mxu0 0.0
        %1483 = vmatpush1.msra.mxu0 0.0
        %1484 = vmatprep.subr.mxu0 0.0
        %1485 = vmatpush1.msra.mxu0 0.0
        %1486 = vmatprep.subr.mxu0 0.0
        %1487 = vmatpush1.msra.mxu0 0.0
        %1488 = vmatprep.subr.mxu0 0.0
        %1489 = vmatpush1.msra.mxu0 0.0
        %1490 = vmatprep.subr.mxu0 0.0
        %1491 = vmatpush1.msra.mxu0 0.0
        %1492 = vmatprep.mubr.f32.mxu0 0.0
        %v1493 = vand.u32 %v1251, 4294901760
        %v1494 = vsub.f32 %v1251, %v1493
        %1495 = vmatmul.mubr.f32.gmra.mrb[0].mxu0 %v1494
        %v1496 = vpop.f32.mrb[0].mxu0
        %v1497 = vadd.f32 %v1417, %v1496
        %v1498 = vpop.f32.mrb[0].mxu0
        %1499 = vmatprep.mubr.f32.mxu0 0.0
        %v1500 = vand.u32 %v1254, 4294901760
        %v1501 = vsub.f32 %v1254, %v1500
        %1502 = vmatmul.mubr.f32.gmra.mrb[0].mxu0 %v1501
        %v1503 = vpop.f32.mrb[0].mxu0
        %v1504 = vadd.f32 %v1423, %v1503
        %v1505 = vpop.f32.mrb[0].mxu0
        %1506 = vdwg.mxu0
        %1507 = vmatprep.subr.mxu0 0.0
        %1508 = vmatpush1.msra.mxu0 %v180
        %1509 = vmatprep.subr.mxu0 0.0
        %1510 = vmatpush1.msra.mxu0 %v181
        %1511 = vmatprep.subr.mxu0 0.0
        %1512 = vmatpush1.msra.mxu0 0.0
        %1513 = vmatprep.subr.mxu0 0.0
        %1514 = vmatpush1.msra.mxu0 0.0
        %1515 = vmatprep.subr.mxu0 0.0
        %1516 = vmatpush1.msra.mxu0 0.0
        %1517 = vmatprep.subr.mxu0 0.0
        %1518 = vmatpush1.msra.mxu0 0.0
        %1519 = vmatprep.subr.mxu0 0.0
        %1520 = vmatpush1.msra.mxu0 0.0
        %1521 = vmatprep.subr.mxu0 0.0
        %1522 = vmatpush1.msra.mxu0 0.0
        %1523 = vmatprep.subr.mxu0 0.0
        %1524 = vmatpush1.msra.mxu0 0.0
        %1525 = vmatprep.subr.mxu0 0.0
        %1526 = vmatpush1.msra.mxu0 0.0
        %1527 = vmatprep.subr.mxu0 0.0
        %1528 = vmatpush1.msra.mxu0 0.0
        %1529 = vmatprep.subr.mxu0 0.0
        %1530 = vmatpush1.msra.mxu0 0.0
        %1531 = vmatprep.subr.mxu0 0.0
        %1532 = vmatpush1.msra.mxu0 0.0
        %1533 = vmatprep.subr.mxu0 0.0
        %1534 = vmatpush1.msra.mxu0 0.0
        %1535 = vmatprep.subr.mxu0 0.0
        %1536 = vmatpush1.msra.mxu0 0.0
        %1537 = vmatprep.subr.mxu0 0.0
        %1538 = vmatpush1.msra.mxu0 0.0
        %1539 = vmatprep.subr.mxu0 0.0
        %1540 = vmatpush1.msra.mxu0 0.0
        %1541 = vmatprep.subr.mxu0 0.0
        %1542 = vmatpush1.msra.mxu0 0.0
        %1543 = vmatprep.subr.mxu0 0.0
        %1544 = vmatpush1.msra.mxu0 0.0
        %1545 = vmatprep.subr.mxu0 0.0
        %1546 = vmatpush1.msra.mxu0 0.0
        %1547 = vmatprep.subr.mxu0 0.0
        %1548 = vmatpush1.msra.mxu0 0.0
        %1549 = vmatprep.subr.mxu0 0.0
        %1550 = vmatpush1.msra.mxu0 0.0
        %1551 = vmatprep.subr.mxu0 0.0
        %1552 = vmatpush1.msra.mxu0 0.0
        %1553 = vmatprep.subr.mxu0 0.0
        %1554 = vmatpush1.msra.mxu0 0.0
        %1555 = vmatprep.subr.mxu0 0.0
        %1556 = vmatpush1.msra.mxu0 0.0
        %1557 = vmatprep.subr.mxu0 0.0
        %1558 = vmatpush1.msra.mxu0 0.0
        %1559 = vmatprep.subr.mxu0 0.0
        %1560 = vmatpush1.msra.mxu0 0.0
        %1561 = vmatprep.subr.mxu0 0.0
        %1562 = vmatpush1.msra.mxu0 0.0
        %1563 = vmatprep.subr.mxu0 0.0
        %1564 = vmatpush1.msra.mxu0 0.0
        %1565 = vmatprep.subr.mxu0 0.0
        %1566 = vmatpush1.msra.mxu0 0.0
        %1567 = vmatprep.subr.mxu0 0.0
        %1568 = vmatpush1.msra.mxu0 0.0
        %1569 = vmatprep.subr.mxu0 0.0
        %1570 = vmatpush1.msra.mxu0 0.0
        %1571 = vmatprep.mubr.f32.mxu0 0.0
        %v1572 = vand.u32 %v1251, 4294901760
        %v1573 = vsub.f32 %v1251, %v1572
        %v1574 = vand.u32 %v1573, 4294901760
        %1575 = vmatmul.mubr.f32.gmra.mrb[0].mxu0 %v1574
        %v1576 = vpop.f32.mrb[0].mxu0
        %v1577 = vadd.f32 %v1497, %v1576
        %v1578 = vpop.f32.mrb[0].mxu0
        %1579 = vmatprep.mubr.f32.mxu0 0.0
        %v1580 = vand.u32 %v1254, 4294901760
        %v1581 = vsub.f32 %v1254, %v1580
        %v1582 = vand.u32 %v1581, 4294901760
        %1583 = vmatmul.mubr.f32.gmra.mrb[0].mxu0 %v1582
        %v1584 = vpop.f32.mrb[0].mxu0
        %v1585 = vadd.f32 %v1504, %v1584
        %v1586 = vpop.f32.mrb[0].mxu0
        %1587 = vdwg.mxu0
        %1588 = vmatprep.subr.mxu0 0.0
        %v1589 = vsub.f32 %v180, %v180
        %v1590 = vand.u32 %v1589, 4294901760
        %1591 = vmatpush1.msra.mxu0 %v1590
        %1592 = vmatprep.subr.mxu0 0.0
        %v1593 = vsub.f32 %v181, %v181
        %v1594 = vand.u32 %v1593, 4294901760
        %1595 = vmatpush1.msra.mxu0 %v1594
        %1596 = vmatprep.subr.mxu0 0.0
        %1597 = vmatpush1.msra.mxu0 0.0
        %1598 = vmatprep.subr.mxu0 0.0
        %1599 = vmatpush1.msra.mxu0 0.0
        %1600 = vmatprep.subr.mxu0 0.0
        %1601 = vmatpush1.msra.mxu0 0.0
        %1602 = vmatprep.subr.mxu0 0.0
        %1603 = vmatpush1.msra.mxu0 0.0
        %1604 = vmatprep.subr.mxu0 0.0
        %1605 = vmatpush1.msra.mxu0 0.0
        %1606 = vmatprep.subr.mxu0 0.0
        %1607 = vmatpush1.msra.mxu0 0.0
        %1608 = vmatprep.subr.mxu0 0.0
        %1609 = vmatpush1.msra.mxu0 0.0
        %1610 = vmatprep.subr.mxu0 0.0
        %1611 = vmatpush1.msra.mxu0 0.0
        %1612 = vmatprep.subr.mxu0 0.0
        %1613 = vmatpush1.msra.mxu0 0.0
        %1614 = vmatprep.subr.mxu0 0.0
        %1615 = vmatpush1.msra.mxu0 0.0
        %1616 = vmatprep.subr.mxu0 0.0
        %1617 = vmatpush1.msra.mxu0 0.0
        %1618 = vmatprep.subr.mxu0 0.0
        %1619 = vmatpush1.msra.mxu0 0.0
        %1620 = vmatprep.subr.mxu0 0.0
        %1621 = vmatpush1.msra.mxu0 0.0
        %1622 = vmatprep.subr.mxu0 0.0
        %1623 = vmatpush1.msra.mxu0 0.0
        %1624 = vmatprep.subr.mxu0 0.0
        %1625 = vmatpush1.msra.mxu0 0.0
        %1626 = vmatprep.subr.mxu0 0.0
        %1627 = vmatpush1.msra.mxu0 0.0
        %1628 = vmatprep.subr.mxu0 0.0
        %1629 = vmatpush1.msra.mxu0 0.0
        %1630 = vmatprep.subr.mxu0 0.0
        %1631 = vmatpush1.msra.mxu0 0.0
        %1632 = vmatprep.subr.mxu0 0.0
        %1633 = vmatpush1.msra.mxu0 0.0
        %1634 = vmatprep.subr.mxu0 0.0
        %1635 = vmatpush1.msra.mxu0 0.0
        %1636 = vmatprep.subr.mxu0 0.0
        %1637 = vmatpush1.msra.mxu0 0.0
        %1638 = vmatprep.subr.mxu0 0.0
        %1639 = vmatpush1.msra.mxu0 0.0
        %1640 = vmatprep.subr.mxu0 0.0
        %1641 = vmatpush1.msra.mxu0 0.0
        %1642 = vmatprep.subr.mxu0 0.0
        %1643 = vmatpush1.msra.mxu0 0.0
        %1644 = vmatprep.subr.mxu0 0.0
        %1645 = vmatpush1.msra.mxu0 0.0
        %1646 = vmatprep.subr.mxu0 0.0
        %1647 = vmatpush1.msra.mxu0 0.0
        %1648 = vmatprep.subr.mxu0 0.0
        %1649 = vmatpush1.msra.mxu0 0.0
        %1650 = vmatprep.subr.mxu0 0.0
        %1651 = vmatpush1.msra.mxu0 0.0
        %1652 = vmatprep.subr.mxu0 0.0
        %1653 = vmatpush1.msra.mxu0 0.0
        %1654 = vmatprep.subr.mxu0 0.0
        %1655 = vmatpush1.msra.mxu0 0.0
        %1656 = vmatprep.mubr.f32.mxu0 0.0
        %v1657 = vand.u32 %v1251, 4294901760
        %1658 = vmatmul.mubr.f32.gmra.mrb[0].mxu0 %v1657
        %v1659 = vpop.f32.mrb[0].mxu0
        %v1660 = vadd.f32 %v1577, %v1659
        %v1661 = vpop.f32.mrb[0].mxu0
        %1662 = vmatprep.mubr.f32.mxu0 0.0
        %v1663 = vand.u32 %v1254, 4294901760
        %1664 = vmatmul.mubr.f32.gmra.mrb[0].mxu0 %v1663
        %v1665 = vpop.f32.mrb[0].mxu0
        %v1666 = vadd.f32 %v1585, %v1665
        %v1667 = vpop.f32.mrb[0].mxu0
        %1668 = vdwg.mxu0
        %1669 = vmatprep.subr.mxu0 0.0
        %1670 = vmatpush1.msra.mxu0 %v180
        %1671 = vmatprep.subr.mxu0 0.0
        %1672 = vmatpush1.msra.mxu0 %v181
        %1673 = vmatprep.subr.mxu0 0.0
        %1674 = vmatpush1.msra.mxu0 0.0
        %1675 = vmatprep.subr.mxu0 0.0
        %1676 = vmatpush1.msra.mxu0 0.0
        %1677 = vmatprep.subr.mxu0 0.0
        %1678 = vmatpush1.msra.mxu0 0.0
        %1679 = vmatprep.subr.mxu0 0.0
        %1680 = vmatpush1.msra.mxu0 0.0
        %1681 = vmatprep.subr.mxu0 0.0
        %1682 = vmatpush1.msra.mxu0 0.0
        %1683 = vmatprep.subr.mxu0 0.0
        %1684 = vmatpush1.msra.mxu0 0.0
        %1685 = vmatprep.subr.mxu0 0.0
        %1686 = vmatpush1.msra.mxu0 0.0
        %1687 = vmatprep.subr.mxu0 0.0
        %1688 = vmatpush1.msra.mxu0 0.0
        %1689 = vmatprep.subr.mxu0 0.0
        %1690 = vmatpush1.msra.mxu0 0.0
        %1691 = vmatprep.subr.mxu0 0.0
        %1692 = vmatpush1.msra.mxu0 0.0
        %1693 = vmatprep.subr.mxu0 0.0
        %1694 = vmatpush1.msra.mxu0 0.0
        %1695 = vmatprep.subr.mxu0 0.0
        %1696 = vmatpush1.msra.mxu0 0.0
        %1697 = vmatprep.subr.mxu0 0.0
        %1698 = vmatpush1.msra.mxu0 0.0
        %1699 = vmatprep.subr.mxu0 0.0
        %1700 = vmatpush1.msra.mxu0 0.0
        %1701 = vmatprep.subr.mxu0 0.0
        %1702 = vmatpush1.msra.mxu0 0.0
        %1703 = vmatprep.subr.mxu0 0.0
        %1704 = vmatpush1.msra.mxu0 0.0
        %1705 = vmatprep.subr.mxu0 0.0
        %1706 = vmatpush1.msra.mxu0 0.0
        %1707 = vmatprep.subr.mxu0 0.0
        %1708 = vmatpush1.msra.mxu0 0.0
        %1709 = vmatprep.subr.mxu0 0.0
        %1710 = vmatpush1.msra.mxu0 0.0
        %1711 = vmatprep.subr.mxu0 0.0
        %1712 = vmatpush1.msra.mxu0 0.0
        %1713 = vmatprep.subr.mxu0 0.0
        %1714 = vmatpush1.msra.mxu0 0.0
        %1715 = vmatprep.subr.mxu0 0.0
        %1716 = vmatpush1.msra.mxu0 0.0
        %1717 = vmatprep.subr.mxu0 0.0
        %1718 = vmatpush1.msra.mxu0 0.0
        %1719 = vmatprep.subr.mxu0 0.0
        %1720 = vmatpush1.msra.mxu0 0.0
        %1721 = vmatprep.subr.mxu0 0.0
        %1722 = vmatpush1.msra.mxu0 0.0
        %1723 = vmatprep.subr.mxu0 0.0
        %1724 = vmatpush1.msra.mxu0 0.0
        %1725 = vmatprep.subr.mxu0 0.0
        %1726 = vmatpush1.msra.mxu0 0.0
        %1727 = vmatprep.subr.mxu0 0.0
        %1728 = vmatpush1.msra.mxu0 0.0
        %1729 = vmatprep.subr.mxu0 0.0
        %1730 = vmatpush1.msra.mxu0 0.0
        %1731 = vmatprep.subr.mxu0 0.0
        %1732 = vmatpush1.msra.mxu0 0.0
        %1733 = vmatprep.mubr.f32.mxu0 0.0
        %v1734 = vand.u32 %v1251, 4294901760
        %1735 = vmatmul.mubr.f32.gmra.mrb[0].mxu0 %v1734
        %v1736 = vpop.f32.mrb[0].mxu0
        %v1737 = vadd.f32 %v1660, %v1736
        %v1738 = vpop.f32.mrb[0].mxu0
        %1739 = vmatprep.mubr.f32.mxu0 0.0
        %v1740 = vand.u32 %v1254, 4294901760
        %1741 = vmatmul.mubr.f32.gmra.mrb[0].mxu0 %v1740
        %v1742 = vpop.f32.mrb[0].mxu0
        %v1743 = vadd.f32 %v1666, %v1742
        %v1744 = vpop.f32.mrb[0].mxu0
        %1745 = vdwg.mxu0
        %s1746 = scalar_lea.vmem %s163, 128
        %1747 = vst.msk [vmem:[%s1746] sm:$0xff] %vm682, %v1737
        %1748 = vst.msk [vmem:[%s1746 + $0x8] sm:$0xff] %vm682, %v1743
        %1751 = vrot.lane.b32.xlu0 %v1737, 124
        %v1752 = vpop.permute.xlu0 %1751
        %1753 = vrot.lane.b32.xlu0 %v1743, 124
        %v1754 = vpop.permute.xlu0 %1753
        %s1757 = scalar_lea.vmem %s163, 144
        %1758 = vst.msk [vmem:[%s1757] sm:$0xff] %vm682, %v1752
        %1759 = vst.msk [vmem:[%s1757 + $0x8] sm:$0xff] %vm682, %v1754
        %1760 = vrot.lane.b32.xlu0 %v1737, 120
        %v1761 = vpop.permute.xlu0 %1760
        %1762 = vrot.lane.b32.xlu0 %v1743, 120
        %v1763 = vpop.permute.xlu0 %1762
        %s1766 = scalar_lea.vmem %s163, 160
        %1767 = vst.msk [vmem:[%s1766] sm:$0xff] %vm682, %v1761
        %1768 = vst.msk [vmem:[%s1766 + $0x8] sm:$0xff] %vm682, %v1763
        %1769 = vrot.lane.b32.xlu0 %v1737, 116
        %v1770 = vpop.permute.xlu0 %1769
        %1771 = vrot.lane.b32.xlu0 %v1743, 116
        %v1772 = vpop.permute.xlu0 %1771
        %s1775 = scalar_lea.vmem %s163, 176
        %1776 = vst.msk [vmem:[%s1775] sm:$0xff] %vm682, %v1770
        %1777 = vst.msk [vmem:[%s1775 + $0x8] sm:$0xff] %vm682, %v1772
        %s1778 = scalar_lea.vmem %s131, 3 [#allocation2]
        %v1779 = vld [vmem:[%s1778] ss:$4 sm:$0xff]
        %s1780 = scalar_lea.vmem %s131, 35 [#allocation2]
        %v1781 = vld [vmem:[%s1780] ss:$4 sm:$0xff]
        %v1783 = vsel %vm185, %v1779, 0
        %v1786 = vsel %vm185, %v1781, 0
        %1788 = vmatprep.subr.mxu0 0.0
        %1789 = vmatpush1.msra.mxu0 %v180
        %1790 = vmatprep.subr.mxu0 0.0
        %1791 = vmatpush1.msra.mxu0 %v181
        %1792 = vmatprep.subr.mxu0 0.0
        %1793 = vmatpush1.msra.mxu0 0.0
        %1794 = vmatprep.subr.mxu0 0.0
        %1795 = vmatpush1.msra.mxu0 0.0
        %1796 = vmatprep.subr.mxu0 0.0
        %1797 = vmatpush1.msra.mxu0 0.0
        %1798 = vmatprep.subr.mxu0 0.0
        %1799 = vmatpush1.msra.mxu0 0.0
        %1800 = vmatprep.subr.mxu0 0.0
        %1801 = vmatpush1.msra.mxu0 0.0
        %1802 = vmatprep.subr.mxu0 0.0
        %1803 = vmatpush1.msra.mxu0 0.0
        %1804 = vmatprep.subr.mxu0 0.0
        %1805 = vmatpush1.msra.mxu0 0.0
        %1806 = vmatprep.subr.mxu0 0.0
        %1807 = vmatpush1.msra.mxu0 0.0
        %1808 = vmatprep.subr.mxu0 0.0
        %1809 = vmatpush1.msra.mxu0 0.0
        %1810 = vmatprep.subr.mxu0 0.0
        %1811 = vmatpush1.msra.mxu0 0.0
        %1812 = vmatprep.subr.mxu0 0.0
        %1813 = vmatpush1.msra.mxu0 0.0
        %1814 = vmatprep.subr.mxu0 0.0
        %1815 = vmatpush1.msra.mxu0 0.0
        %1816 = vmatprep.subr.mxu0 0.0
        %1817 = vmatpush1.msra.mxu0 0.0
        %1818 = vmatprep.subr.mxu0 0.0
        %1819 = vmatpush1.msra.mxu0 0.0
        %1820 = vmatprep.subr.mxu0 0.0
        %1821 = vmatpush1.msra.mxu0 0.0
        %1822 = vmatprep.subr.mxu0 0.0
        %1823 = vmatpush1.msra.mxu0 0.0
        %1824 = vmatprep.subr.mxu0 0.0
        %1825 = vmatpush1.msra.mxu0 0.0
        %1826 = vmatprep.subr.mxu0 0.0
        %1827 = vmatpush1.msra.mxu0 0.0
        %1828 = vmatprep.subr.mxu0 0.0
        %1829 = vmatpush1.msra.mxu0 0.0
        %1830 = vmatprep.subr.mxu0 0.0
        %1831 = vmatpush1.msra.mxu0 0.0
        %1832 = vmatprep.subr.mxu0 0.0
        %1833 = vmatpush1.msra.mxu0 0.0
        %1834 = vmatprep.subr.mxu0 0.0
        %1835 = vmatpush1.msra.mxu0 0.0
        %1836 = vmatprep.subr.mxu0 0.0
        %1837 = vmatpush1.msra.mxu0 0.0
        %1838 = vmatprep.subr.mxu0 0.0
        %1839 = vmatpush1.msra.mxu0 0.0
        %1840 = vmatprep.subr.mxu0 0.0
        %1841 = vmatpush1.msra.mxu0 0.0
        %1842 = vmatprep.subr.mxu0 0.0
        %1843 = vmatpush1.msra.mxu0 0.0
        %1844 = vmatprep.subr.mxu0 0.0
        %1845 = vmatpush1.msra.mxu0 0.0
        %1846 = vmatprep.subr.mxu0 0.0
        %1847 = vmatpush1.msra.mxu0 0.0
        %1848 = vmatprep.subr.mxu0 0.0
        %1849 = vmatpush1.msra.mxu0 0.0
        %1850 = vmatprep.subr.mxu0 0.0
        %1851 = vmatpush1.msra.mxu0 0.0
        %1852 = vmatprep.mubr.f32.mxu0 0.0
        %v1853 = vand.u32 %v1783, 4294901760
        %v1854 = vsub.f32 %v1783, %v1853
        %v1855 = vand.u32 %v1854, 4294901760
        %v1856 = vsub.f32 %v1854, %v1855
        %v1857 = vand.u32 %v1856, 4294901760
        %1858 = vmatmul.mubr.f32.gmra.mrb[0].mxu0 %v1857
        %v1859 = vpop.f32.mrb[0].mxu0
        %v1860 = vadd.f32 0.0, %v1859
        %v1861 = vpop.f32.mrb[0].mxu0
        %1862 = vmatprep.mubr.f32.mxu0 0.0
        %v1863 = vand.u32 %v1786, 4294901760
        %v1864 = vsub.f32 %v1786, %v1863
        %v1865 = vand.u32 %v1864, 4294901760
        %v1866 = vsub.f32 %v1864, %v1865
        %v1867 = vand.u32 %v1866, 4294901760
        %1868 = vmatmul.mubr.f32.gmra.mrb[0].mxu0 %v1867
        %v1869 = vpop.f32.mrb[0].mxu0
        %v1870 = vadd.f32 0.0, %v1869
        %v1871 = vpop.f32.mrb[0].mxu0
        %1872 = vdwg.mxu0
        %1873 = vmatprep.subr.mxu0 0.0
        %v1874 = vsub.f32 %v180, %v180
        %v1875 = vand.u32 %v1874, 4294901760
        %v1876 = vsub.f32 %v1874, %v1875
        %v1877 = vand.u32 %v1876, 4294901760
        %1878 = vmatpush1.msra.mxu0 %v1877
        %1879 = vmatprep.subr.mxu0 0.0
        %v1880 = vsub.f32 %v181, %v181
        %v1881 = vand.u32 %v1880, 4294901760
        %v1882 = vsub.f32 %v1880, %v1881
        %v1883 = vand.u32 %v1882, 4294901760
        %1884 = vmatpush1.msra.mxu0 %v1883
        %1885 = vmatprep.subr.mxu0 0.0
        %1886 = vmatpush1.msra.mxu0 0.0
        %1887 = vmatprep.subr.mxu0 0.0
        %1888 = vmatpush1.msra.mxu0 0.0
        %1889 = vmatprep.subr.mxu0 0.0
        %1890 = vmatpush1.msra.mxu0 0.0
        %1891 = vmatprep.subr.mxu0 0.0
        %1892 = vmatpush1.msra.mxu0 0.0
        %1893 = vmatprep.subr.mxu0 0.0
        %1894 = vmatpush1.msra.mxu0 0.0
        %1895 = vmatprep.subr.mxu0 0.0
        %1896 = vmatpush1.msra.mxu0 0.0
        %1897 = vmatprep.subr.mxu0 0.0
        %1898 = vmatpush1.msra.mxu0 0.0
        %1899 = vmatprep.subr.mxu0 0.0
        %1900 = vmatpush1.msra.mxu0 0.0
        %1901 = vmatprep.subr.mxu0 0.0
        %1902 = vmatpush1.msra.mxu0 0.0
        %1903 = vmatprep.subr.mxu0 0.0
        %1904 = vmatpush1.msra.mxu0 0.0
        %1905 = vmatprep.subr.mxu0 0.0
        %1906 = vmatpush1.msra.mxu0 0.0
        %1907 = vmatprep.subr.mxu0 0.0
        %1908 = vmatpush1.msra.mxu0 0.0
        %1909 = vmatprep.subr.mxu0 0.0
        %1910 = vmatpush1.msra.mxu0 0.0
        %1911 = vmatprep.subr.mxu0 0.0
        %1912 = vmatpush1.msra.mxu0 0.0
        %1913 = vmatprep.subr.mxu0 0.0
        %1914 = vmatpush1.msra.mxu0 0.0
        %1915 = vmatprep.subr.mxu0 0.0
        %1916 = vmatpush1.msra.mxu0 0.0
        %1917 = vmatprep.subr.mxu0 0.0
        %1918 = vmatpush1.msra.mxu0 0.0
        %1919 = vmatprep.subr.mxu0 0.0
        %1920 = vmatpush1.msra.mxu0 0.0
        %1921 = vmatprep.subr.mxu0 0.0
        %1922 = vmatpush1.msra.mxu0 0.0
        %1923 = vmatprep.subr.mxu0 0.0
        %1924 = vmatpush1.msra.mxu0 0.0
        %1925 = vmatprep.subr.mxu0 0.0
        %1926 = vmatpush1.msra.mxu0 0.0
        %1927 = vmatprep.subr.mxu0 0.0
        %1928 = vmatpush1.msra.mxu0 0.0
        %1929 = vmatprep.subr.mxu0 0.0
        %1930 = vmatpush1.msra.mxu0 0.0
        %1931 = vmatprep.subr.mxu0 0.0
        %1932 = vmatpush1.msra.mxu0 0.0
        %1933 = vmatprep.subr.mxu0 0.0
        %1934 = vmatpush1.msra.mxu0 0.0
        %1935 = vmatprep.subr.mxu0 0.0
        %1936 = vmatpush1.msra.mxu0 0.0
        %1937 = vmatprep.subr.mxu0 0.0
        %1938 = vmatpush1.msra.mxu0 0.0
        %1939 = vmatprep.subr.mxu0 0.0
        %1940 = vmatpush1.msra.mxu0 0.0
        %1941 = vmatprep.subr.mxu0 0.0
        %1942 = vmatpush1.msra.mxu0 0.0
        %1943 = vmatprep.subr.mxu0 0.0
        %1944 = vmatpush1.msra.mxu0 0.0
        %1945 = vmatprep.mubr.f32.mxu0 0.0
        %v1946 = vand.u32 %v1783, 4294901760
        %1947 = vmatmul.mubr.f32.gmra.mrb[0].mxu0 %v1946
        %v1948 = vpop.f32.mrb[0].mxu0
        %v1949 = vadd.f32 %v1860, %v1948
        %v1950 = vpop.f32.mrb[0].mxu0
        %1951 = vmatprep.mubr.f32.mxu0 0.0
        %v1952 = vand.u32 %v1786, 4294901760
        %1953 = vmatmul.mubr.f32.gmra.mrb[0].mxu0 %v1952
        %v1954 = vpop.f32.mrb[0].mxu0
        %v1955 = vadd.f32 %v1870, %v1954
        %v1956 = vpop.f32.mrb[0].mxu0
        %1957 = vdwg.mxu0
        %1958 = vmatprep.subr.mxu0 0.0
        %v1959 = vsub.f32 %v180, %v180
        %1960 = vmatpush1.msra.mxu0 %v1959
        %1961 = vmatprep.subr.mxu0 0.0
        %v1962 = vsub.f32 %v181, %v181
        %1963 = vmatpush1.msra.mxu0 %v1962
        %1964 = vmatprep.subr.mxu0 0.0
        %1965 = vmatpush1.msra.mxu0 0.0
        %1966 = vmatprep.subr.mxu0 0.0
        %1967 = vmatpush1.msra.mxu0 0.0
        %1968 = vmatprep.subr.mxu0 0.0
        %1969 = vmatpush1.msra.mxu0 0.0
        %1970 = vmatprep.subr.mxu0 0.0
        %1971 = vmatpush1.msra.mxu0 0.0
        %1972 = vmatprep.subr.mxu0 0.0
        %1973 = vmatpush1.msra.mxu0 0.0
        %1974 = vmatprep.subr.mxu0 0.0
        %1975 = vmatpush1.msra.mxu0 0.0
        %1976 = vmatprep.subr.mxu0 0.0
        %1977 = vmatpush1.msra.mxu0 0.0
        %1978 = vmatprep.subr.mxu0 0.0
        %1979 = vmatpush1.msra.mxu0 0.0
        %1980 = vmatprep.subr.mxu0 0.0
        %1981 = vmatpush1.msra.mxu0 0.0
        %1982 = vmatprep.subr.mxu0 0.0
        %1983 = vmatpush1.msra.mxu0 0.0
        %1984 = vmatprep.subr.mxu0 0.0
        %1985 = vmatpush1.msra.mxu0 0.0
        %1986 = vmatprep.subr.mxu0 0.0
        %1987 = vmatpush1.msra.mxu0 0.0
        %1988 = vmatprep.subr.mxu0 0.0
        %1989 = vmatpush1.msra.mxu0 0.0
        %1990 = vmatprep.subr.mxu0 0.0
        %1991 = vmatpush1.msra.mxu0 0.0
        %1992 = vmatprep.subr.mxu0 0.0
        %1993 = vmatpush1.msra.mxu0 0.0
        %1994 = vmatprep.subr.mxu0 0.0
        %1995 = vmatpush1.msra.mxu0 0.0
        %1996 = vmatprep.subr.mxu0 0.0
        %1997 = vmatpush1.msra.mxu0 0.0
        %1998 = vmatprep.subr.mxu0 0.0
        %1999 = vmatpush1.msra.mxu0 0.0
        %2000 = vmatprep.subr.mxu0 0.0
        %2001 = vmatpush1.msra.mxu0 0.0
        %2002 = vmatprep.subr.mxu0 0.0
        %2003 = vmatpush1.msra.mxu0 0.0
        %2004 = vmatprep.subr.mxu0 0.0
        %2005 = vmatpush1.msra.mxu0 0.0
        %2006 = vmatprep.subr.mxu0 0.0
        %2007 = vmatpush1.msra.mxu0 0.0
        %2008 = vmatprep.subr.mxu0 0.0
        %2009 = vmatpush1.msra.mxu0 0.0
        %2010 = vmatprep.subr.mxu0 0.0
        %2011 = vmatpush1.msra.mxu0 0.0
        %2012 = vmatprep.subr.mxu0 0.0
        %2013 = vmatpush1.msra.mxu0 0.0
        %2014 = vmatprep.subr.mxu0 0.0
        %2015 = vmatpush1.msra.mxu0 0.0
        %2016 = vmatprep.subr.mxu0 0.0
        %2017 = vmatpush1.msra.mxu0 0.0
        %2018 = vmatprep.subr.mxu0 0.0
        %2019 = vmatpush1.msra.mxu0 0.0
        %2020 = vmatprep.subr.mxu0 0.0
        %2021 = vmatpush1.msra.mxu0 0.0
        %2022 = vmatprep.subr.mxu0 0.0
        %2023 = vmatpush1.msra.mxu0 0.0
        %2024 = vmatprep.mubr.f32.mxu0 0.0
        %v2025 = vand.u32 %v1783, 4294901760
        %v2026 = vsub.f32 %v1783, %v2025
        %2027 = vmatmul.mubr.f32.gmra.mrb[0].mxu0 %v2026
        %v2028 = vpop.f32.mrb[0].mxu0
        %v2029 = vadd.f32 %v1949, %v2028
        %v2030 = vpop.f32.mrb[0].mxu0
        %2031 = vmatprep.mubr.f32.mxu0 0.0
        %v2032 = vand.u32 %v1786, 4294901760
        %v2033 = vsub.f32 %v1786, %v2032
        %2034 = vmatmul.mubr.f32.gmra.mrb[0].mxu0 %v2033
        %v2035 = vpop.f32.mrb[0].mxu0
        %v2036 = vadd.f32 %v1955, %v2035
        %v2037 = vpop.f32.mrb[0].mxu0
        %2038 = vdwg.mxu0
        %2039 = vmatprep.subr.mxu0 0.0
        %2040 = vmatpush1.msra.mxu0 %v180
        %2041 = vmatprep.subr.mxu0 0.0
        %2042 = vmatpush1.msra.mxu0 %v181
        %2043 = vmatprep.subr.mxu0 0.0
        %2044 = vmatpush1.msra.mxu0 0.0
        %2045 = vmatprep.subr.mxu0 0.0
        %2046 = vmatpush1.msra.mxu0 0.0
        %2047 = vmatprep.subr.mxu0 0.0
        %2048 = vmatpush1.msra.mxu0 0.0
        %2049 = vmatprep.subr.mxu0 0.0
        %2050 = vmatpush1.msra.mxu0 0.0
        %2051 = vmatprep.subr.mxu0 0.0
        %2052 = vmatpush1.msra.mxu0 0.0
        %2053 = vmatprep.subr.mxu0 0.0
        %2054 = vmatpush1.msra.mxu0 0.0
        %2055 = vmatprep.subr.mxu0 0.0
        %2056 = vmatpush1.msra.mxu0 0.0
        %2057 = vmatprep.subr.mxu0 0.0
        %2058 = vmatpush1.msra.mxu0 0.0
        %2059 = vmatprep.subr.mxu0 0.0
        %2060 = vmatpush1.msra.mxu0 0.0
        %2061 = vmatprep.subr.mxu0 0.0
        %2062 = vmatpush1.msra.mxu0 0.0
        %2063 = vmatprep.subr.mxu0 0.0
        %2064 = vmatpush1.msra.mxu0 0.0
        %2065 = vmatprep.subr.mxu0 0.0
        %2066 = vmatpush1.msra.mxu0 0.0
        %2067 = vmatprep.subr.mxu0 0.0
        %2068 = vmatpush1.msra.mxu0 0.0
        %2069 = vmatprep.subr.mxu0 0.0
        %2070 = vmatpush1.msra.mxu0 0.0
        %2071 = vmatprep.subr.mxu0 0.0
        %2072 = vmatpush1.msra.mxu0 0.0
        %2073 = vmatprep.subr.mxu0 0.0
        %2074 = vmatpush1.msra.mxu0 0.0
        %2075 = vmatprep.subr.mxu0 0.0
        %2076 = vmatpush1.msra.mxu0 0.0
        %2077 = vmatprep.subr.mxu0 0.0
        %2078 = vmatpush1.msra.mxu0 0.0
        %2079 = vmatprep.subr.mxu0 0.0
        %2080 = vmatpush1.msra.mxu0 0.0
        %2081 = vmatprep.subr.mxu0 0.0
        %2082 = vmatpush1.msra.mxu0 0.0
        %2083 = vmatprep.subr.mxu0 0.0
        %2084 = vmatpush1.msra.mxu0 0.0
        %2085 = vmatprep.subr.mxu0 0.0
        %2086 = vmatpush1.msra.mxu0 0.0
        %2087 = vmatprep.subr.mxu0 0.0
        %2088 = vmatpush1.msra.mxu0 0.0
        %2089 = vmatprep.subr.mxu0 0.0
        %2090 = vmatpush1.msra.mxu0 0.0
        %2091 = vmatprep.subr.mxu0 0.0
        %2092 = vmatpush1.msra.mxu0 0.0
        %2093 = vmatprep.subr.mxu0 0.0
        %2094 = vmatpush1.msra.mxu0 0.0
        %2095 = vmatprep.subr.mxu0 0.0
        %2096 = vmatpush1.msra.mxu0 0.0
        %2097 = vmatprep.subr.mxu0 0.0
        %2098 = vmatpush1.msra.mxu0 0.0
        %2099 = vmatprep.subr.mxu0 0.0
        %2100 = vmatpush1.msra.mxu0 0.0
        %2101 = vmatprep.subr.mxu0 0.0
        %2102 = vmatpush1.msra.mxu0 0.0
        %2103 = vmatprep.mubr.f32.mxu0 0.0
        %v2104 = vand.u32 %v1783, 4294901760
        %v2105 = vsub.f32 %v1783, %v2104
        %v2106 = vand.u32 %v2105, 4294901760
        %2107 = vmatmul.mubr.f32.gmra.mrb[0].mxu0 %v2106
        %v2108 = vpop.f32.mrb[0].mxu0
        %v2109 = vadd.f32 %v2029, %v2108
        %v2110 = vpop.f32.mrb[0].mxu0
        %2111 = vmatprep.mubr.f32.mxu0 0.0
        %v2112 = vand.u32 %v1786, 4294901760
        %v2113 = vsub.f32 %v1786, %v2112
        %v2114 = vand.u32 %v2113, 4294901760
        %2115 = vmatmul.mubr.f32.gmra.mrb[0].mxu0 %v2114
        %v2116 = vpop.f32.mrb[0].mxu0
        %v2117 = vadd.f32 %v2036, %v2116
        %v2118 = vpop.f32.mrb[0].mxu0
        %2119 = vdwg.mxu0
        %2120 = vmatprep.subr.mxu0 0.0
        %v2121 = vsub.f32 %v180, %v180
        %v2122 = vand.u32 %v2121, 4294901760
        %2123 = vmatpush1.msra.mxu0 %v2122
        %2124 = vmatprep.subr.mxu0 0.0
        %v2125 = vsub.f32 %v181, %v181
        %v2126 = vand.u32 %v2125, 4294901760
        %2127 = vmatpush1.msra.mxu0 %v2126
        %2128 = vmatprep.subr.mxu0 0.0
        %2129 = vmatpush1.msra.mxu0 0.0
        %2130 = vmatprep.subr.mxu0 0.0
        %2131 = vmatpush1.msra.mxu0 0.0
        %2132 = vmatprep.subr.mxu0 0.0
        %2133 = vmatpush1.msra.mxu0 0.0
        %2134 = vmatprep.subr.mxu0 0.0
        %2135 = vmatpush1.msra.mxu0 0.0
        %2136 = vmatprep.subr.mxu0 0.0
        %2137 = vmatpush1.msra.mxu0 0.0
        %2138 = vmatprep.subr.mxu0 0.0
        %2139 = vmatpush1.msra.mxu0 0.0
        %2140 = vmatprep.subr.mxu0 0.0
        %2141 = vmatpush1.msra.mxu0 0.0
        %2142 = vmatprep.subr.mxu0 0.0
        %2143 = vmatpush1.msra.mxu0 0.0
        %2144 = vmatprep.subr.mxu0 0.0
        %2145 = vmatpush1.msra.mxu0 0.0
        %2146 = vmatprep.subr.mxu0 0.0
        %2147 = vmatpush1.msra.mxu0 0.0
        %2148 = vmatprep.subr.mxu0 0.0
        %2149 = vmatpush1.msra.mxu0 0.0
        %2150 = vmatprep.subr.mxu0 0.0
        %2151 = vmatpush1.msra.mxu0 0.0
        %2152 = vmatprep.subr.mxu0 0.0
        %2153 = vmatpush1.msra.mxu0 0.0
        %2154 = vmatprep.subr.mxu0 0.0
        %2155 = vmatpush1.msra.mxu0 0.0
        %2156 = vmatprep.subr.mxu0 0.0
        %2157 = vmatpush1.msra.mxu0 0.0
        %2158 = vmatprep.subr.mxu0 0.0
        %2159 = vmatpush1.msra.mxu0 0.0
        %2160 = vmatprep.subr.mxu0 0.0
        %2161 = vmatpush1.msra.mxu0 0.0
        %2162 = vmatprep.subr.mxu0 0.0
        %2163 = vmatpush1.msra.mxu0 0.0
        %2164 = vmatprep.subr.mxu0 0.0
        %2165 = vmatpush1.msra.mxu0 0.0
        %2166 = vmatprep.subr.mxu0 0.0
        %2167 = vmatpush1.msra.mxu0 0.0
        %2168 = vmatprep.subr.mxu0 0.0
        %2169 = vmatpush1.msra.mxu0 0.0
        %2170 = vmatprep.subr.mxu0 0.0
        %2171 = vmatpush1.msra.mxu0 0.0
        %2172 = vmatprep.subr.mxu0 0.0
        %2173 = vmatpush1.msra.mxu0 0.0
        %2174 = vmatprep.subr.mxu0 0.0
        %2175 = vmatpush1.msra.mxu0 0.0
        %2176 = vmatprep.subr.mxu0 0.0
        %2177 = vmatpush1.msra.mxu0 0.0
        %2178 = vmatprep.subr.mxu0 0.0
        %2179 = vmatpush1.msra.mxu0 0.0
        %2180 = vmatprep.subr.mxu0 0.0
        %2181 = vmatpush1.msra.mxu0 0.0
        %2182 = vmatprep.subr.mxu0 0.0
        %2183 = vmatpush1.msra.mxu0 0.0
        %2184 = vmatprep.subr.mxu0 0.0
        %2185 = vmatpush1.msra.mxu0 0.0
        %2186 = vmatprep.subr.mxu0 0.0
        %2187 = vmatpush1.msra.mxu0 0.0
        %2188 = vmatprep.mubr.f32.mxu0 0.0
        %v2189 = vand.u32 %v1783, 4294901760
        %2190 = vmatmul.mubr.f32.gmra.mrb[0].mxu0 %v2189
        %v2191 = vpop.f32.mrb[0].mxu0
        %v2192 = vadd.f32 %v2109, %v2191
        %v2193 = vpop.f32.mrb[0].mxu0
        %2194 = vmatprep.mubr.f32.mxu0 0.0
        %v2195 = vand.u32 %v1786, 4294901760
        %2196 = vmatmul.mubr.f32.gmra.mrb[0].mxu0 %v2195
        %v2197 = vpop.f32.mrb[0].mxu0
        %v2198 = vadd.f32 %v2117, %v2197
        %v2199 = vpop.f32.mrb[0].mxu0
        %2200 = vdwg.mxu0
        %2201 = vmatprep.subr.mxu0 0.0
        %2202 = vmatpush1.msra.mxu0 %v180
        %2203 = vmatprep.subr.mxu0 0.0
        %2204 = vmatpush1.msra.mxu0 %v181
        %2205 = vmatprep.subr.mxu0 0.0
        %2206 = vmatpush1.msra.mxu0 0.0
        %2207 = vmatprep.subr.mxu0 0.0
        %2208 = vmatpush1.msra.mxu0 0.0
        %2209 = vmatprep.subr.mxu0 0.0
        %2210 = vmatpush1.msra.mxu0 0.0
        %2211 = vmatprep.subr.mxu0 0.0
        %2212 = vmatpush1.msra.mxu0 0.0
        %2213 = vmatprep.subr.mxu0 0.0
        %2214 = vmatpush1.msra.mxu0 0.0
        %2215 = vmatprep.subr.mxu0 0.0
        %2216 = vmatpush1.msra.mxu0 0.0
        %2217 = vmatprep.subr.mxu0 0.0
        %2218 = vmatpush1.msra.mxu0 0.0
        %2219 = vmatprep.subr.mxu0 0.0
        %2220 = vmatpush1.msra.mxu0 0.0
        %2221 = vmatprep.subr.mxu0 0.0
        %2222 = vmatpush1.msra.mxu0 0.0
        %2223 = vmatprep.subr.mxu0 0.0
        %2224 = vmatpush1.msra.mxu0 0.0
        %2225 = vmatprep.subr.mxu0 0.0
        %2226 = vmatpush1.msra.mxu0 0.0
        %2227 = vmatprep.subr.mxu0 0.0
        %2228 = vmatpush1.msra.mxu0 0.0
        %2229 = vmatprep.subr.mxu0 0.0
        %2230 = vmatpush1.msra.mxu0 0.0
        %2231 = vmatprep.subr.mxu0 0.0
        %2232 = vmatpush1.msra.mxu0 0.0
        %2233 = vmatprep.subr.mxu0 0.0
        %2234 = vmatpush1.msra.mxu0 0.0
        %2235 = vmatprep.subr.mxu0 0.0
        %2236 = vmatpush1.msra.mxu0 0.0
        %2237 = vmatprep.subr.mxu0 0.0
        %2238 = vmatpush1.msra.mxu0 0.0
        %2239 = vmatprep.subr.mxu0 0.0
        %2240 = vmatpush1.msra.mxu0 0.0
        %2241 = vmatprep.subr.mxu0 0.0
        %2242 = vmatpush1.msra.mxu0 0.0
        %2243 = vmatprep.subr.mxu0 0.0
        %2244 = vmatpush1.msra.mxu0 0.0
        %2245 = vmatprep.subr.mxu0 0.0
        %2246 = vmatpush1.msra.mxu0 0.0
        %2247 = vmatprep.subr.mxu0 0.0
        %2248 = vmatpush1.msra.mxu0 0.0
        %2249 = vmatprep.subr.mxu0 0.0
        %2250 = vmatpush1.msra.mxu0 0.0
        %2251 = vmatprep.subr.mxu0 0.0
        %2252 = vmatpush1.msra.mxu0 0.0
        %2253 = vmatprep.subr.mxu0 0.0
        %2254 = vmatpush1.msra.mxu0 0.0
        %2255 = vmatprep.subr.mxu0 0.0
        %2256 = vmatpush1.msra.mxu0 0.0
        %2257 = vmatprep.subr.mxu0 0.0
        %2258 = vmatpush1.msra.mxu0 0.0
        %2259 = vmatprep.subr.mxu0 0.0
        %2260 = vmatpush1.msra.mxu0 0.0
        %2261 = vmatprep.subr.mxu0 0.0
        %2262 = vmatpush1.msra.mxu0 0.0
        %2263 = vmatprep.subr.mxu0 0.0
        %2264 = vmatpush1.msra.mxu0 0.0
        %2265 = vmatprep.mubr.f32.mxu0 0.0
        %v2266 = vand.u32 %v1783, 4294901760
        %2267 = vmatmul.mubr.f32.gmra.mrb[0].mxu0 %v2266
        %v2268 = vpop.f32.mrb[0].mxu0
        %v2269 = vadd.f32 %v2192, %v2268
        %v2270 = vpop.f32.mrb[0].mxu0
        %2271 = vmatprep.mubr.f32.mxu0 0.0
        %v2272 = vand.u32 %v1786, 4294901760
        %2273 = vmatmul.mubr.f32.gmra.mrb[0].mxu0 %v2272
        %v2274 = vpop.f32.mrb[0].mxu0
        %v2275 = vadd.f32 %v2198, %v2274
        %v2276 = vpop.f32.mrb[0].mxu0
        %2277 = vdwg.mxu0
        %s2278 = scalar_lea.vmem %s163, 192
        %2279 = vst.msk [vmem:[%s2278] sm:$0xff] %vm682, %v2269
        %2280 = vst.msk [vmem:[%s2278 + $0x8] sm:$0xff] %vm682, %v2275
        %2283 = vrot.lane.b32.xlu0 %v2269, 124
        %v2284 = vpop.permute.xlu0 %2283
        %2285 = vrot.lane.b32.xlu0 %v2275, 124
        %v2286 = vpop.permute.xlu0 %2285
        %s2289 = scalar_lea.vmem %s163, 208
        %2290 = vst.msk [vmem:[%s2289] sm:$0xff] %vm682, %v2284
        %2291 = vst.msk [vmem:[%s2289 + $0x8] sm:$0xff] %vm682, %v2286
        %2292 = vrot.lane.b32.xlu0 %v2269, 120
        %v2293 = vpop.permute.xlu0 %2292
        %2294 = vrot.lane.b32.xlu0 %v2275, 120
        %v2295 = vpop.permute.xlu0 %2294
        %s2298 = scalar_lea.vmem %s163, 224
        %2299 = vst.msk [vmem:[%s2298] sm:$0xff] %vm682, %v2293
        %2300 = vst.msk [vmem:[%s2298 + $0x8] sm:$0xff] %vm682, %v2295
        %2301 = vrot.lane.b32.xlu0 %v2269, 116
        %v2302 = vpop.permute.xlu0 %2301
        %2303 = vrot.lane.b32.xlu0 %v2275, 116
        %v2304 = vpop.permute.xlu0 %2303
        %s2307 = scalar_lea.vmem %s163, 240
        %2308 = vst.msk [vmem:[%s2307] sm:$0xff] %vm682, %v2302
        %2309 = vst.msk [vmem:[%s2307 + $0x8] sm:$0xff] %vm682, %v2304
        %s2310 = smul.u32 2, %s20
        %p2311 = scmp.lt.s32.totalorder %s19, 1
        %s2312 = scalar_select %p2311, %s19, 1
        %p2313 = scmp.lt.s32.totalorder %s2310, 1
        %s2314 = scalar_select %p2313, %s2310, 1
        %s2315 = smul.addr %s2312, 32
        %s2316 = sadd.s32 %s2314, %s2315
        %s2317 = smul.addr %s2316, 8
        %s2318 = scalar_lea.vmem %s1, %s2317
        // Predicated region
        $region29: #{space_to_depth.1} parent=23 // pred_check
          %p2319 = pneg %p75
        $region30: #{space_to_depth.1} parent=23 // pred_check_branch
          %2321 = sbr.rel (%p2319) target = $region32
        $region31: #{space_to_depth.1} parent=23 // pred_region
          %s2322 = smul.u32 2, %s20
        $region32: #{space_to_depth.1} parent=23 // pred_fallthru
          _
      $region24: #{space_to_depth.1} parent=5 // pred_fallthru
        _
      %p2323 = scmp.le.s32.totalorder 2, %s10
      // Predicated region
      $region33: #{space_to_depth.1} parent=5 // pred_check
        %p2324 = pneg %p2323
      $region34: #{space_to_depth.1} parent=5 // pred_check_branch
        %2326 = sbr.rel (%p2324) target = $region36
      $region35: #{space_to_depth.1} parent=5 // pred_region
        %s2327 = ssub.s32 %s10, 2
        // Predicated region
        $region37: #{space_to_depth.1} parent=35 // pred_check
          %p2328 = pneg %p81
        $region38: #{space_to_depth.1} parent=35 // pred_check_branch
          %2330 = sbr.rel (%p2328) target = $region40
        $region39: #{space_to_depth.1} parent=35 // pred_region
          %s2331 = smul.u32 2, %s22
          %p2332 = scmp.lt.s32.totalorder %s21, 1
          %s2333 = scalar_select %p2332, %s21, 1
          %p2334 = scmp.lt.s32.totalorder %s2331, 1
          %s2335 = scalar_select %p2334, %s2331, 1
          %s2336 = smul.addr %s2333, 32
          %s2337 = sadd.s32 %s2335, %s2336
          %s2338 = smul.addr %s2337, 8
          %s2339 = scalar_lea.vmem %s1, %s2338
        $region40: #{space_to_depth.1} parent=35 // pred_fallthru
          _
      $region36: #{space_to_depth.1} parent=5 // pred_fallthru
        _
    $region6: #{space_to_depth.1} parent=1 // loop_footer
      %s14 = sadd.s32 1, %s10
    $region7: #{space_to_depth.1} parent=1 // loop_footer_branch
      %9 = sbr.rel target = $region3
    $region8: #{space_to_depth.1} parent=1 // loop_exit
      _
    %2340 = vsyncpa [#allocation3], 1
    %s2341 = scalar_lea.sflag [#allocation3], 1
    %2342 = vsyncpa %s2341, 1

</llo_original>
